<compile_context>
chip_gen: v7x
topology: tpu7x:2x2x1
jax: 0.10.0
libtpu: 0.0.40
codegen_flags: <defaults>
</compile_context>

<pallas_src>
import functools

import jax
import jax.numpy as jnp
from jax.experimental import pallas as pl
from jax.experimental.pallas import tpu as pltpu


def _nextblock_kernel(is_shortcut, stride,
                      x_ref, wa_ref, ba_ref, w2_ref, b2_ref,
                      w3_ref, b3_ref, o_ref):
    """One batch slab: all convs, BN (folded), ReLUs and the residual in VMEM."""
    Nb, H, W, Cin = x_ref.shape
    Ho, Wo, Cout = o_ref.shape[1], o_ref.shape[2], o_ref.shape[3]
    mid = w2_ref.shape[1]

    x = x_ref[...]
    if stride > 1:
        # conv1 & shortcut are 1x1 convs with this stride -> pure subsampling.
        # TODO(synk): this still DMAs the full (H, W) tile and discards rows in
        # VMEM; a manual strided DMA (memory_space=pl.ANY + pl.ds(..., stride))
        # would cut the fetch by stride**2 for strided blocks.
        x = x[:, ::stride, ::stride, :]
    M = Nb * Ho * Wo
    xm_bf = x.reshape(M, Cin).astype(jnp.bfloat16)

    # Fused [shortcut | conv1] 1x1 convs: one bf16 MXU matmul, f32 accumulation.
    # Shortcut columns come first so the wide slice starts at lane 0.
    d = jnp.dot(xm_bf, wa_ref[...], preferred_element_type=jnp.float32) + ba_ref[...]
    if is_shortcut:
        sc = d[:, :Cout]                                  # shortcut conv -> BNs
        a = jnp.maximum(d[:, Cout:Cout + mid], 0.0)       # conv1 -> BN1 -> ReLU
    else:
        sc = x.reshape(M, Cin).astype(jnp.float32)        # identity (Cin == Cout)
        a = jnp.maximum(d, 0.0)

    # conv2: 3x3 depthwise (groups == mid), padding=1, stride=1, folded BN, ReLU.
    # Zero padding built once as a value (two concats); the 9 taps are full-slab
    # MACs accumulated in a local value -- no scratch-ref read-modify-write.
    # TODO(synk): mid=32 fills only 32/128 lanes here; a lane-dense
    # (Wo//4, 4*mid) repack with pltpu.roll W-shifts would cut VALU work ~4x
    # (left out: the kernel is HBM-bound and the repack adds relayout risk).
    a4 = a.reshape(Nb, Ho, Wo, mid)                       # f32, VPU path
    w2 = w2_ref[...]                                      # (9, mid) f32 taps
    zw = jnp.zeros((Nb, Ho, 1, mid), jnp.float32)
    ap = jnp.concatenate([zw, a4, zw], axis=2)            # (Nb, Ho, Wo+2, mid)
    zh = jnp.zeros((Nb, 1, Wo + 2, mid), jnp.float32)
    ap = jnp.concatenate([zh, ap, zh], axis=1)            # (Nb, Ho+2, Wo+2, mid)
    acc = a4 * w2[4:5, :]                                 # center tap
    for dh in range(3):
        for dw in range(3):
            if dh == 1 and dw == 1:
                continue
            k = 3 * dh + dw
            acc = acc + ap[:, dh:dh + Ho, dw:dw + Wo, :] * w2[k:k + 1, :]
    b = jnp.maximum(acc + b2_ref[...], 0.0)

    # conv3 1x1 + folded BN (bf16 MXU, f32 acc), residual add, final ReLU.
    bm_bf = b.reshape(M, mid).astype(jnp.bfloat16)
    c = jnp.dot(bm_bf, w3_ref[...], preferred_element_type=jnp.float32) + b3_ref[...]
    y = jnp.maximum(c + sc, 0.0)
    # TODO(synk): Cout=64 < 128, so this store masks half the lanes.  A fully
    # lane-dense (Ho, Wo*Cout) slab needs a sublane->lane relayout (merging W
    # into the minor dim) whose Mosaic reshape support is version-dependent, so
    # it is left out for compile robustness; bf16 activation I/O (dtype follows
    # x) already halves the write-back bytes.
    o_ref[...] = y.reshape(Nb, Ho, Wo, Cout).astype(o_ref.dtype)


def _vmem_capacity_bytes():
    try:
        return int(pltpu.get_tpu_info().vmem_capacity_bytes)
    except Exception:
        return 64 * 1024 * 1024          # conservative default (v7x per-TC VMEM)


def _lane_pad(c, lane=128):
    return -(-c // lane) * lane


def _step_vmem_bytes(nb, H, W, Cin, Ho, Wo, mid, cout, io_itemsize):
    """Rough per-grid-step VMEM footprint: double-buffered I/O blocks plus the
    kernel's f32 value temporaries (x, d, padded a, acc, b, sc/c, y)."""
    m = nb * Ho * Wo
    inp = 2 * nb * H * W * _lane_pad(Cin) * io_itemsize
    out = 2 * nb * Ho * Wo * _lane_pad(cout) * io_itemsize
    tmp = 4 * m * (_lane_pad(Cin) + 2 * _lane_pad(mid + cout)
                   + 3 * _lane_pad(mid) + 2 * _lane_pad(cout))
    return inp + out + tmp


def _pick_block_n(n, rows_per_image, step_bytes_fn, budget):
    """Smallest images-per-step that fits the VMEM budget; grown only as far as
    needed to give the MXU >= 512 rows per matmul while keeping >= 2 grid steps
    (both v7x TensorCores get work under dimension_semantics=('parallel',))."""
    nb = 1
    for cand in range(2, min(n, 4) + 1):
        if n % cand:
            continue
        if nb * rows_per_image >= 512:   # M already large enough for the MXU
            break
        if n // cand < 2:                # keep >= 2 pipeline / megacore steps
            break
        if step_bytes_fn(cand) > budget:
            break
        nb = cand
    return nb
    # TODO(synk): for very small N with very large H*W, an H-tiled grid axis
    # with a 1-row halo (manual DMA) would give more pipeline steps.


def nextblock_forward_nhwc(x, params, *, stride=1, is_shortcut=False, block_n=None):
    """x: (N, H, W, Cin) float32 or bfloat16.  Returns
    (N, ceil(H/s), ceil(W/s), Cout) in the same dtype (carry bf16 between
    blocks to halve activation HBM traffic)."""
    w1, b1, w2, b2, w3, b3, ws, bs = params
    N, H, W, Cin = x.shape
    mid = w1.shape[1]
    Cout = w3.shape[1]
    Ho, Wo = -(-H // stride), -(-W // stride)
    if not is_shortcut:
        assert Cin == Cout and stride == 1, \
            "identity shortcut requires Cin == Cout and stride == 1"

    # Fuse shortcut + conv1 1x1 weights into one MXU matmul, shortcut first.
    if is_shortcut:
        wa = jnp.concatenate([ws, w1], axis=1)            # (Cin, Cout + mid)
        ba = jnp.concatenate([bs, b1], axis=1)            # (1,   Cout + mid)
    else:
        wa, ba = w1, b1                                   # (Cin, mid), (1, mid)
    wa = wa.astype(jnp.bfloat16)                          # bf16 MXU operands
    w3b = w3.astype(jnp.bfloat16)
    w2p = w2.reshape(9, mid)                              # (3,3,mid) -> (9, mid)

    io_itemsize = jnp.dtype(x.dtype).itemsize
    vmem_limit = min(int(_vmem_capacity_bytes() * 3 // 4), 96 * 1024 * 1024)
    step_bytes = lambda nb: _step_vmem_bytes(nb, H, W, Cin, Ho, Wo, mid, Cout,
                                             io_itemsize)
    if block_n is None:
        block_n = _pick_block_n(N, Ho * Wo, step_bytes, int(vmem_limit * 0.8))
    assert N % block_n == 0
    steps = N // block_n

    kernel = functools.partial(_nextblock_kernel, is_shortcut, stride)
    out = pl.pallas_call(
        kernel,
        out_shape=jax.ShapeDtypeStruct((N, Ho, Wo, Cout), x.dtype),
        grid_spec=pltpu.PrefetchScalarGridSpec(
            num_scalar_prefetch=0,
            grid=(steps,),
            in_specs=[
                pl.BlockSpec((block_n, H, W, Cin), lambda n: (n, 0, 0, 0)),
                pl.BlockSpec(wa.shape, lambda n: (0, 0)),
                pl.BlockSpec(ba.shape, lambda n: (0, 0)),
                pl.BlockSpec((9, mid), lambda n: (0, 0)),
                pl.BlockSpec((1, mid), lambda n: (0, 0)),
                pl.BlockSpec((mid, Cout), lambda n: (0, 0)),
                pl.BlockSpec((1, Cout), lambda n: (0, 0)),
            ],
            out_specs=pl.BlockSpec((block_n, Ho, Wo, Cout),
                                   lambda n: (n, 0, 0, 0)),
        ),
        compiler_params=pltpu.CompilerParams(
            dimension_semantics=("parallel",),
            vmem_limit_bytes=vmem_limit),
    )(x, wa, ba, w2p, b2, w3b, b3)
    return out


def nextblock_forward(x_nchw, params, *, stride=1, is_shortcut=False, block_n=None):
    """PyTorch-layout wrapper: (N, Cin, H, W) -> (N, Cout, Ho, Wo).  For stacks
    of blocks prefer nextblock_forward_nhwc and transpose once at entry/exit."""
    x = jnp.transpose(x_nchw, (0, 2, 3, 1))               # NCHW -> NHWC
    y = nextblock_forward_nhwc(x, params, stride=stride,
                               is_shortcut=is_shortcut, block_n=block_n)
    return jnp.transpose(y, (0, 3, 1, 2))                 # NHWC -> NCHW


def make_params(key, in_channels, out_channels):
    """Deterministic synthetic weights; BN (eval mode) folded into conv weights."""
    mid = out_channels // 2
    assert mid % 32 == 0, "module requires out_channels//2 divisible by 32"
    # TODO(synk): only the depthwise case (group size == 1, i.e. mid == 32) is
    # implemented; group size > 1 would need block-diagonal 3x3 matmuls.
    assert mid == 32, "kernel implements the depthwise case (group size == 1)"
    eps = 1e-5
    keys = jax.random.split(key, 24)

    def bn_fold(k0, k1, k2, k3, c):
        gamma = 1.0 + 0.1 * jax.random.normal(k0, (c,), jnp.float32)
        beta = 0.1 * jax.random.normal(k1, (c,), jnp.float32)
        mean = 0.1 * jax.random.normal(k2, (c,), jnp.float32)
        var = jax.random.uniform(k3, (c,), jnp.float32, minval=0.5, maxval=1.5)
        scale = gamma / jnp.sqrt(var + eps)
        shift = beta - mean * scale
        return scale, shift

    # conv1 (torch (mid, Cin, 1, 1) -> (Cin, mid)) + BN1
    w1 = jax.random.normal(keys[0], (in_channels, mid), jnp.float32) / jnp.sqrt(in_channels)
    s1, t1 = bn_fold(keys[1], keys[2], keys[3], keys[4], mid)
    # conv2 depthwise (torch (mid, 1, 3, 3) -> (3, 3, mid)) + BN2
    w2 = jax.random.normal(keys[5], (3, 3, mid), jnp.float32) / 3.0
    s2, t2 = bn_fold(keys[6], keys[7], keys[8], keys[9], mid)
    # conv3 (torch (Cout, mid, 1, 1) -> (mid, Cout)) + BN3
    w3 = jax.random.normal(keys[10], (mid, out_channels), jnp.float32) / jnp.sqrt(mid)
    s3, t3 = bn_fold(keys[11], keys[12], keys[13], keys[14], out_channels)
    # shortcut conv (torch (Cout, Cin, 1, 1) -> (Cin, Cout)) + conv bias + BNs
    ws = jax.random.normal(keys[15], (in_channels, out_channels), jnp.float32) / jnp.sqrt(in_channels)
    wb = 0.1 * jax.random.normal(keys[16], (out_channels,), jnp.float32)
    ss, ts = bn_fold(keys[17], keys[18], keys[19], keys[20], out_channels)

    w1f = w1 * s1[None, :]
    b1f = t1.reshape(1, mid)
    w2f = w2 * s2[None, None, :]
    b2f = t2.reshape(1, mid)
    w3f = w3 * s3[None, :]
    b3f = t3.reshape(1, out_channels)
    wsf = ws * ss[None, :]
    bsf = (wb * ss + ts).reshape(1, out_channels)
    return (w1f, b1f, w2f, b2f, w3f, b3f, wsf, bsf)


def _reference(x_nchw, params, *, stride=1, is_shortcut=False):
    """Pure-JAX reference using the same folded weights and the same bf16
    matmul / f32 depthwise numerics as the kernel (for verification)."""
    w1, b1, w2, b2, w3, b3, ws, bs = params
    x = jnp.transpose(x_nchw, (0, 2, 3, 1))
    if stride > 1:
        x = x[:, ::stride, ::stride, :]
    xb = x.astype(jnp.bfloat16)
    a = jnp.maximum(
        jnp.einsum('nhwc,cd->nhwd', xb, w1.astype(jnp.bfloat16),
                   preferred_element_type=jnp.float32) + b1[0], 0.0)
    # depthwise 3x3, padding=1, exact f32 (same math as the kernel)
    N, H, W, mid = a.shape
    ap = jnp.pad(a, ((0, 0), (1, 1), (1, 1), (0, 0)))
    acc = jnp.zeros_like(a)
    for dh in range(3):
        for dw in range(3):
            acc = acc + ap[:, dh:dh + H, dw:dw + W, :] * w2[dh, dw, :]
    b = jnp.maximum(acc + b2[0], 0.0)
    c = jnp.einsum('nhwc,cd->nhwd', b.astype(jnp.bfloat16), w3.astype(jnp.bfloat16),
                   preferred_element_type=jnp.float32) + b3[0]
    if is_shortcut:
        sc = jnp.einsum('nhwc,cd->nhwd', xb, ws.astype(jnp.bfloat16),
                        preferred_element_type=jnp.float32) + bs[0]
    else:
        sc = x
    y = jnp.maximum(c + sc, 0.0)
    return jnp.transpose(y, (0, 3, 1, 2))


if __name__ == "__main__":
    # groups=32 in conv2 forces out_channels//2 >= 32, so the smallest config
    # consistent with the module is out_channels=64 (depthwise group size 1).
    N, Cin, H, W = 2, 64, 16, 16
    Cout = 64

    key = jax.random.PRNGKey(0)
    kx, kp = jax.random.split(key)
    x = jax.random.normal(kx, (N, Cin, H, W), jnp.float32)
    params = make_params(kp, Cin, Cout)

    # 1) projection-shortcut block, f32 activations (strict check).
    out = jax.block_until_ready(
        nextblock_forward(x, params, stride=1, is_shortcut=True))
    ref = _reference(x, params, stride=1, is_shortcut=True)
    assert out.shape == (N, Cout, H, W)
    err = float(jnp.max(jnp.abs(out - ref)))
    assert jnp.allclose(out, ref, atol=2e-3, rtol=2e-3), \
        f"shortcut f32 max abs diff {err}"

    # 2) identity-shortcut block (Cin == Cout, stride == 1), f32.
    out_id = jax.block_until_ready(
        nextblock_forward(x, params, stride=1, is_shortcut=False))
    ref_id = _reference(x, params, stride=1, is_shortcut=False)
    err_id = float(jnp.max(jnp.abs(out_id - ref_id)))
    assert jnp.allclose(out_id, ref_id, atol=2e-3, rtol=2e-3), \
        f"identity f32 max abs diff {err_id}"

    # 3) bf16 activation I/O (inter-block carry): matmul numerics are unchanged
    #    (operands were already bf16); only the stored output is bf16-quantized,
    #    so compare with a looser tolerance.
    out_bf = jax.block_until_ready(
        nextblock_forward(x.astype(jnp.bfloat16), params,
                          stride=1, is_shortcut=True))
    assert out_bf.dtype == jnp.bfloat16
    err_bf = float(jnp.max(jnp.abs(out_bf.astype(jnp.float32) - ref)))
    assert jnp.allclose(out_bf.astype(jnp.float32), ref, atol=5e-2, rtol=5e-2), \
        f"shortcut bf16 max abs diff {err_bf}"

    print("KERNEL_OK")
</pallas_src>

<mosaic_0001>
module attributes {stable_mosaic.version = 11 : i64} {
  func.func @_nextblock_kernel(%arg0: i32, %arg1: memref<1x16x16x64xf32, #tpu.memory_space<vmem>>, %arg2: memref<64x96xbf16, #tpu.memory_space<vmem>>, %arg3: memref<1x96xf32, #tpu.memory_space<vmem>>, %arg4: memref<9x32xf32, #tpu.memory_space<vmem>>, %arg5: memref<1x32xf32, #tpu.memory_space<vmem>>, %arg6: memref<32x64xbf16, #tpu.memory_space<vmem>>, %arg7: memref<1x64xf32, #tpu.memory_space<vmem>>, %arg8: memref<1x16x16x64xf32, #tpu.memory_space<vmem>>) attributes {dimension_semantics = [#tpu.dimension_semantics<parallel>], iteration_bounds = array<i64: 2>, scalar_prefetch = 0 : i64, scratch_operands = 0 : i64, tpu.core_type = #tpu.core_type<tc>, window_params = [{transform_indices = @transform_0, window_bounds = array<i64: 1, 16, 16, 64>}, {pipeline_mode = #tpu.pipeline_mode<synchronous>, transform_indices = @transform_1, window_bounds = array<i64: 64, 96>}, {pipeline_mode = #tpu.pipeline_mode<synchronous>, transform_indices = @transform_2, window_bounds = array<i64: 1, 96>}, {pipeline_mode = #tpu.pipeline_mode<synchronous>, transform_indices = @transform_3, window_bounds = array<i64: 9, 32>}, {pipeline_mode = #tpu.pipeline_mode<synchronous>, transform_indices = @transform_4, window_bounds = array<i64: 1, 32>}, {pipeline_mode = #tpu.pipeline_mode<synchronous>, transform_indices = @transform_5, window_bounds = array<i64: 32, 64>}, {pipeline_mode = #tpu.pipeline_mode<synchronous>, transform_indices = @transform_6, window_bounds = array<i64: 1, 64>}, {transform_indices = @transform_7, window_bounds = array<i64: 1, 16, 16, 64>}]} {
    %c0 = arith.constant 0 : index
    %c0_0 = arith.constant 0 : index
    %c0_1 = arith.constant 0 : index
    %c0_2 = arith.constant 0 : index
    %0 = vector.load %arg1[%c0, %c0_0, %c0_1, %c0_2] : memref<1x16x16x64xf32, #tpu.memory_space<vmem>>, vector<1x16x16x64xf32>
    %1 = vector.shape_cast %0 : vector<1x16x16x64xf32> to vector<256x64xf32>
    %2 = arith.truncf %1 : vector<256x64xf32> to vector<256x64xbf16>
    %c0_3 = arith.constant 0 : index
    %c0_4 = arith.constant 0 : index
    %3 = vector.load %arg2[%c0_3, %c0_4] : memref<64x96xbf16, #tpu.memory_space<vmem>>, vector<64x96xbf16>
    %cst = arith.constant dense<0.000000e+00> : vector<256x96xf32>
    %4 = tpu.matmul %2, %3, %cst {dimension_numbers = #tpu.dot_dimension_numbers<[1], [0], [0], [1], [0, 0, 1, 1], [], []>} : vector<256x64xbf16>, vector<64x96xbf16>, vector<256x96xf32> -> vector<256x96xf32>
    %c0_5 = arith.constant 0 : index
    %c0_6 = arith.constant 0 : index
    %5 = vector.load %arg3[%c0_5, %c0_6] : memref<1x96xf32, #tpu.memory_space<vmem>>, vector<1x96xf32>
    %6 = vector.broadcast %5 : vector<1x96xf32> to vector<256x96xf32>
    %7 = arith.addf %4, %6 : vector<256x96xf32>
    %8 = vector.extract_strided_slice %7 {offsets = [0, 0], sizes = [256, 64], strides = [1, 1]} : vector<256x96xf32> to vector<256x64xf32>
    %9 = vector.extract_strided_slice %7 {offsets = [0, 64], sizes = [256, 32], strides = [1, 1]} : vector<256x96xf32> to vector<256x32xf32>
    %cst_7 = arith.constant 0.000000e+00 : f32
    %10 = vector.broadcast %cst_7 : f32 to vector<256x32xf32>
    %11 = arith.maximumf %9, %10 : vector<256x32xf32>
    %12 = vector.shape_cast %11 : vector<256x32xf32> to vector<1x16x16x32xf32>
    %c0_8 = arith.constant 0 : index
    %c0_9 = arith.constant 0 : index
    %13 = vector.load %arg4[%c0_8, %c0_9] : memref<9x32xf32, #tpu.memory_space<vmem>>, vector<9x32xf32>
    %cst_10 = arith.constant 0.000000e+00 : f32
    %14 = vector.broadcast %cst_10 : f32 to vector<1x16x1x32xf32>
    %15 = tpu.concatenate %14, %12, %14 in 2 : vector<1x16x1x32xf32>, vector<1x16x16x32xf32>, vector<1x16x1x32xf32> -> vector<1x16x18x32xf32>
    %cst_11 = arith.constant 0.000000e+00 : f32
    %16 = vector.broadcast %cst_11 : f32 to vector<1x1x18x32xf32>
    %17 = tpu.concatenate %16, %15, %16 in 1 : vector<1x1x18x32xf32>, vector<1x16x18x32xf32>, vector<1x1x18x32xf32> -> vector<1x18x18x32xf32>
    %18 = vector.extract_strided_slice %13 {offsets = [4, 0], sizes = [1, 32], strides = [1, 1]} : vector<9x32xf32> to vector<1x32xf32>
    %19 = vector.shape_cast %18 : vector<1x32xf32> to vector<1x1x1x32xf32>
    %20 = vector.broadcast %19 : vector<1x1x1x32xf32> to vector<1x16x16x32xf32>
    %21 = arith.mulf %12, %20 : vector<1x16x16x32xf32>
    %22 = vector.extract_strided_slice %17 {offsets = [0, 0, 0, 0], sizes = [1, 16, 16, 32], strides = [1, 1, 1, 1]} : vector<1x18x18x32xf32> to vector<1x16x16x32xf32>
    %23 = vector.extract_strided_slice %13 {offsets = [0, 0], sizes = [1, 32], strides = [1, 1]} : vector<9x32xf32> to vector<1x32xf32>
    %24 = vector.shape_cast %23 : vector<1x32xf32> to vector<1x1x1x32xf32>
    %25 = vector.broadcast %24 : vector<1x1x1x32xf32> to vector<1x16x16x32xf32>
    %26 = arith.mulf %22, %25 : vector<1x16x16x32xf32>
    %27 = arith.addf %21, %26 : vector<1x16x16x32xf32>
    %28 = vector.extract_strided_slice %17 {offsets = [0, 0, 1, 0], sizes = [1, 16, 16, 32], strides = [1, 1, 1, 1]} : vector<1x18x18x32xf32> to vector<1x16x16x32xf32>
    %29 = vector.extract_strided_slice %13 {offsets = [1, 0], sizes = [1, 32], strides = [1, 1]} : vector<9x32xf32> to vector<1x32xf32>
    %30 = vector.shape_cast %29 : vector<1x32xf32> to vector<1x1x1x32xf32>
    %31 = vector.broadcast %30 : vector<1x1x1x32xf32> to vector<1x16x16x32xf32>
    %32 = arith.mulf %28, %31 : vector<1x16x16x32xf32>
    %33 = arith.addf %27, %32 : vector<1x16x16x32xf32>
    %34 = vector.extract_strided_slice %17 {offsets = [0, 0, 2, 0], sizes = [1, 16, 16, 32], strides = [1, 1, 1, 1]} : vector<1x18x18x32xf32> to vector<1x16x16x32xf32>
    %35 = vector.extract_strided_slice %13 {offsets = [2, 0], sizes = [1, 32], strides = [1, 1]} : vector<9x32xf32> to vector<1x32xf32>
    %36 = vector.shape_cast %35 : vector<1x32xf32> to vector<1x1x1x32xf32>
    %37 = vector.broadcast %36 : vector<1x1x1x32xf32> to vector<1x16x16x32xf32>
    %38 = arith.mulf %34, %37 : vector<1x16x16x32xf32>
    %39 = arith.addf %33, %38 : vector<1x16x16x32xf32>
    %40 = vector.extract_strided_slice %17 {offsets = [0, 1, 0, 0], sizes = [1, 16, 16, 32], strides = [1, 1, 1, 1]} : vector<1x18x18x32xf32> to vector<1x16x16x32xf32>
    %41 = vector.extract_strided_slice %13 {offsets = [3, 0], sizes = [1, 32], strides = [1, 1]} : vector<9x32xf32> to vector<1x32xf32>
    %42 = vector.shape_cast %41 : vector<1x32xf32> to vector<1x1x1x32xf32>
    %43 = vector.broadcast %42 : vector<1x1x1x32xf32> to vector<1x16x16x32xf32>
    %44 = arith.mulf %40, %43 : vector<1x16x16x32xf32>
    %45 = arith.addf %39, %44 : vector<1x16x16x32xf32>
    %46 = vector.extract_strided_slice %17 {offsets = [0, 1, 2, 0], sizes = [1, 16, 16, 32], strides = [1, 1, 1, 1]} : vector<1x18x18x32xf32> to vector<1x16x16x32xf32>
    %47 = vector.extract_strided_slice %13 {offsets = [5, 0], sizes = [1, 32], strides = [1, 1]} : vector<9x32xf32> to vector<1x32xf32>
    %48 = vector.shape_cast %47 : vector<1x32xf32> to vector<1x1x1x32xf32>
    %49 = vector.broadcast %48 : vector<1x1x1x32xf32> to vector<1x16x16x32xf32>
    %50 = arith.mulf %46, %49 : vector<1x16x16x32xf32>
    %51 = arith.addf %45, %50 : vector<1x16x16x32xf32>
    %52 = vector.extract_strided_slice %17 {offsets = [0, 2, 0, 0], sizes = [1, 16, 16, 32], strides = [1, 1, 1, 1]} : vector<1x18x18x32xf32> to vector<1x16x16x32xf32>
    %53 = vector.extract_strided_slice %13 {offsets = [6, 0], sizes = [1, 32], strides = [1, 1]} : vector<9x32xf32> to vector<1x32xf32>
    %54 = vector.shape_cast %53 : vector<1x32xf32> to vector<1x1x1x32xf32>
    %55 = vector.broadcast %54 : vector<1x1x1x32xf32> to vector<1x16x16x32xf32>
    %56 = arith.mulf %52, %55 : vector<1x16x16x32xf32>
    %57 = arith.addf %51, %56 : vector<1x16x16x32xf32>
    %58 = vector.extract_strided_slice %17 {offsets = [0, 2, 1, 0], sizes = [1, 16, 16, 32], strides = [1, 1, 1, 1]} : vector<1x18x18x32xf32> to vector<1x16x16x32xf32>
    %59 = vector.extract_strided_slice %13 {offsets = [7, 0], sizes = [1, 32], strides = [1, 1]} : vector<9x32xf32> to vector<1x32xf32>
    %60 = vector.shape_cast %59 : vector<1x32xf32> to vector<1x1x1x32xf32>
    %61 = vector.broadcast %60 : vector<1x1x1x32xf32> to vector<1x16x16x32xf32>
    %62 = arith.mulf %58, %61 : vector<1x16x16x32xf32>
    %63 = arith.addf %57, %62 : vector<1x16x16x32xf32>
    %64 = vector.extract_strided_slice %17 {offsets = [0, 2, 2, 0], sizes = [1, 16, 16, 32], strides = [1, 1, 1, 1]} : vector<1x18x18x32xf32> to vector<1x16x16x32xf32>
    %65 = vector.extract_strided_slice %13 {offsets = [8, 0], sizes = [1, 32], strides = [1, 1]} : vector<9x32xf32> to vector<1x32xf32>
    %66 = vector.shape_cast %65 : vector<1x32xf32> to vector<1x1x1x32xf32>
    %67 = vector.broadcast %66 : vector<1x1x1x32xf32> to vector<1x16x16x32xf32>
    %68 = arith.mulf %64, %67 : vector<1x16x16x32xf32>
    %69 = arith.addf %63, %68 : vector<1x16x16x32xf32>
    %c0_12 = arith.constant 0 : index
    %c0_13 = arith.constant 0 : index
    %70 = vector.load %arg5[%c0_12, %c0_13] : memref<1x32xf32, #tpu.memory_space<vmem>>, vector<1x32xf32>
    %71 = vector.shape_cast %70 : vector<1x32xf32> to vector<1x1x1x32xf32>
    %72 = vector.broadcast %71 : vector<1x1x1x32xf32> to vector<1x16x16x32xf32>
    %73 = arith.addf %69, %72 : vector<1x16x16x32xf32>
    %cst_14 = arith.constant 0.000000e+00 : f32
    %74 = vector.broadcast %cst_14 : f32 to vector<1x16x16x32xf32>
    %75 = arith.maximumf %73, %74 : vector<1x16x16x32xf32>
    %76 = vector.shape_cast %75 : vector<1x16x16x32xf32> to vector<256x32xf32>
    %77 = arith.truncf %76 : vector<256x32xf32> to vector<256x32xbf16>
    %c0_15 = arith.constant 0 : index
    %c0_16 = arith.constant 0 : index
    %78 = vector.load %arg6[%c0_15, %c0_16] : memref<32x64xbf16, #tpu.memory_space<vmem>>, vector<32x64xbf16>
    %cst_17 = arith.constant dense<0.000000e+00> : vector<256x64xf32>
    %79 = tpu.matmul %77, %78, %cst_17 {dimension_numbers = #tpu.dot_dimension_numbers<[1], [0], [0], [1], [0, 0, 1, 1], [], []>} : vector<256x32xbf16>, vector<32x64xbf16>, vector<256x64xf32> -> vector<256x64xf32>
    %c0_18 = arith.constant 0 : index
    %c0_19 = arith.constant 0 : index
    %80 = vector.load %arg7[%c0_18, %c0_19] : memref<1x64xf32, #tpu.memory_space<vmem>>, vector<1x64xf32>
    %81 = vector.broadcast %80 : vector<1x64xf32> to vector<256x64xf32>
    %82 = arith.addf %79, %81 : vector<256x64xf32>
    %83 = arith.addf %82, %8 : vector<256x64xf32>
    %cst_20 = arith.constant 0.000000e+00 : f32
    %84 = vector.broadcast %cst_20 : f32 to vector<256x64xf32>
    %85 = arith.maximumf %83, %84 : vector<256x64xf32>
    %86 = vector.shape_cast %85 : vector<256x64xf32> to vector<1x16x16x64xf32>
    %c0_21 = arith.constant 0 : index
    %c0_22 = arith.constant 0 : index
    %c0_23 = arith.constant 0 : index
    %c0_24 = arith.constant 0 : index
    %87 = vector.load %arg8[%c0_21, %c0_22, %c0_23, %c0_24] : memref<1x16x16x64xf32, #tpu.memory_space<vmem>>, vector<1x16x16x64xf32>
    tpu.vector_store %arg8[%c0_21, %c0_22, %c0_23, %c0_24], %86 {strides = array<i32>} : memref<1x16x16x64xf32, #tpu.memory_space<vmem>>, vector<1x16x16x64xf32>,
    return
  }
  func.func @transform_0(%arg0: i32) -> (i32, i32, i32, i32) {
    %c0_i32 = arith.constant 0 : i32
    %c0_i32_0 = arith.constant 0 : i32
    %c0_i32_1 = arith.constant 0 : i32
    %c0_i32_2 = arith.constant 0 : i32
    return %arg0, %c0_i32, %c0_i32_0, %c0_i32_1 : i32, i32, i32, i32
  }
  func.func @transform_1(%arg0: i32) -> (i32, i32) {
    %c0_i32 = arith.constant 0 : i32
    %c0_i32_0 = arith.constant 0 : i32
    %c0_i32_1 = arith.constant 0 : i32
    return %c0_i32, %c0_i32_0 : i32, i32
  }
  func.func @transform_2(%arg0: i32) -> (i32, i32) {
    %c0_i32 = arith.constant 0 : i32
    %c0_i32_0 = arith.constant 0 : i32
    %c0_i32_1 = arith.constant 0 : i32
    return %c0_i32, %c0_i32_0 : i32, i32
  }
  func.func @transform_3(%arg0: i32) -> (i32, i32) {
    %c0_i32 = arith.constant 0 : i32
    %c0_i32_0 = arith.constant 0 : i32
    %c0_i32_1 = arith.constant 0 : i32
    return %c0_i32, %c0_i32_0 : i32, i32
  }
  func.func @transform_4(%arg0: i32) -> (i32, i32) {
    %c0_i32 = arith.constant 0 : i32
    %c0_i32_0 = arith.constant 0 : i32
    %c0_i32_1 = arith.constant 0 : i32
    return %c0_i32, %c0_i32_0 : i32, i32
  }
  func.func @transform_5(%arg0: i32) -> (i32, i32) {
    %c0_i32 = arith.constant 0 : i32
    %c0_i32_0 = arith.constant 0 : i32
    %c0_i32_1 = arith.constant 0 : i32
    return %c0_i32, %c0_i32_0 : i32, i32
  }
  func.func @transform_6(%arg0: i32) -> (i32, i32) {
    %c0_i32 = arith.constant 0 : i32
    %c0_i32_0 = arith.constant 0 : i32
    %c0_i32_1 = arith.constant 0 : i32
    return %c0_i32, %c0_i32_0 : i32, i32
  }
  func.func @transform_7(%arg0: i32) -> (i32, i32, i32, i32) {
    %c0_i32 = arith.constant 0 : i32
    %c0_i32_0 = arith.constant 0 : i32
    %c0_i32_1 = arith.constant 0 : i32
    %c0_i32_2 = arith.constant 0 : i32
    return %arg0, %c0_i32, %c0_i32_0, %c0_i32_1 : i32, i32, i32, i32
  }
}

</mosaic_0001>

<llo_original>
// kernel: tpu_custom_call.1
$region0: #{tpu_custom_call.1}
  #allocation0 [shape = 'u32[]', space=smem, size = 0x4, offset = 0x4, fixed_abs, tag = 'smem constant byte address 0x4 - core index']
  #allocation1 [shape = 'u32[144,128]{1,0:T(1,128)}', space=vmem, size = 0x12000, scoped, tag = 'internal scratch']
  %s0 = inlined_call_operand.hbm [shape: f32[2,16,16,64], index: 0, kind: input, shape index: {}]
  %s1 = inlined_call_operand.hbm [shape: bf16[64,96], index: 1, kind: input, shape index: {}]
  %s2 = inlined_call_operand.vmem [shape: f32[1,96], index: 2, kind: input, shape index: {}]
  %s3 = inlined_call_operand.hbm [shape: f32[9,32], index: 3, kind: input, shape index: {}]
  %s4 = inlined_call_operand.vmem [shape: f32[1,32], index: 4, kind: input, shape index: {}]
  %s5 = inlined_call_operand.vmem [shape: bf16[32,64], index: 5, kind: input, shape index: {}]
  %s6 = inlined_call_operand.vmem [shape: f32[1,64], index: 6, kind: input, shape index: {}]
  %s7 = inlined_call_operand.hbm [shape: f32[2,16,16,64], index: 7, kind: output, shape index: {}]
  %s8 = sld [smem:[#allocation0]]
  $region73: #{tpu_custom_call.1} parent=0
    _
  %s10 = ssub.s32 1, %s8
  %s11 = scalar_select 0, %s10, %s8
  $region1: #{tpu_custom_call.1} parent=0
    #allocation2 [shape = 'u8[262144]{0}', space=vmem, size = 0x40000, scoped, tag = 'input window, operand 0']
    #allocation3 [shape = 's32[2]{0}', space=sflag, size = 0x8, scoped, tag = 'scoped memory for tpu_custom_call.1']
    #allocation4 [shape = 's32[2]{0}', space=sflag, size = 0x8, scoped, tag = 'scoped memory for tpu_custom_call.1']
    #allocation5 [shape = 'u8[16384]{0}', space=vmem, size = 0x4000, scoped, tag = 'input window, operand 1, single buffered']
    #allocation6 [shape = 's32[1]{0}', space=sflag, size = 0x4, scoped, tag = 'scoped memory for tpu_custom_call.1']
    #allocation7 [shape = 'u8[8192]{0}', space=vmem, size = 0x2000, scoped, tag = 'input window, operand 3, single buffered']
    #allocation8 [shape = 'u8[262144]{0}', space=vmem, size = 0x40000, scoped, tag = 'output window, operand 0']
    %12 = vsyncpa [#allocation3], 0
    %s13 = scalar_lea.sflag [#allocation3], 1
    %14 = vsyncpa %s13, 0
    %15 = vsyncpa [#allocation6], 0
    %16 = vsyncpa [#allocation4], 0
    %s17 = scalar_lea.sflag [#allocation4], 1
    %18 = vsyncpa %s17, 0
    loop: start=0, step=1, limit=4
    $region2: #{tpu_custom_call.1} parent=1 // loop_pre_header
      _
    $region3: #{tpu_custom_call.1} parent=1 // loop_header
      %s20 = sphi 0, %s24
      %p21 = scmp.ge.s32.totalorder %s20, 4
      %s30 = sphi 0, %s32
      %s33 = sphi 0, %s30
      %s34 = sphi 0, %s33
      %s50 = sphi 0, %s34
      %s54 = sphi 0, %s54
      %s56 = sphi 0, %s54
      %s57 = sphi 0, %s56
      %s71 = sphi 0, %s57
      %s75 = sphi 0, %s75
      %s77 = sphi 0, %s75
      %s78 = sphi 0, %s77
      %s92 = sphi 0, %s78
      %s96 = sphi 0, %s96
      %s98 = sphi 0, %s96
      %s99 = sphi 0, %s98
      %s113 = sphi 0, %s99
      %s117 = sphi 0, %s117
      %s119 = sphi 0, %s117
      %s120 = sphi 0, %s119
      %s134 = sphi 0, %s120
      %s138 = sphi 0, %s138
      %s140 = sphi 0, %s138
      %s141 = sphi 0, %s140
      %s155 = sphi 0, %s141
      %s159 = sphi 0, %s159
      %s161 = sphi 0, %s159
      %s162 = sphi 0, %s161
      %s176 = sphi 0, %s162
      %s182 = sphi 0, %s184
      %s185 = sphi 0, %s182
      %s186 = sphi 0, %s185
      %s202 = sphi 0, %s186
    $region4: #{tpu_custom_call.1} parent=1 // loop_header_branch
      %23 = sbr.rel (%p21) target = $region8
    $region5: #{tpu_custom_call.1} parent=1 // loop_body
      %s25 = ssub.s32 %s20, 1
      %s26 = ssub.s32 %s20, 2
      %s27 = sadd.s32 %s20, 1
      %s28 = ssub.s32 %s20, %s27
      %p29 = scmp.eq.s32.totalorder %s28, 0
      %s31 = sadd.s32 %s30, 1
      %s32 = scalar_select %p29, %s30, %s31
      %p35 = pneg %p29
      %p36 = scmp.eq.s32.totalorder %s20, 1
      %p37 = por %p35, %p36
      %p38 = scmp.ne.s32.totalorder %s30, %s33
      %p39 = scmp.eq.s32.totalorder %s20, 0
      %p40 = por %p38, %p39
      %p41 = scmp.ne.s32.totalorder %s30, %s33
      %p42 = scmp.eq.s32.totalorder %s25, 1
      %p43 = por %p41, %p42
      %p44 = scmp.ne.s32.totalorder %s33, %s34
      %p45 = scmp.eq.s32.totalorder %s25, 0
      %p46 = por %p44, %p45
      %p47 = scmp.ne.s32.totalorder %s33, %s34
      %p48 = scmp.eq.s32.totalorder %s26, 1
      %p49 = por %p47, %p48
      %p51 = scmp.ne.s32.totalorder %s34, %s50
      %p52 = scmp.eq.s32.totalorder %s26, 0
      %p53 = por %p51, %p52
      %s55 = sadd.s32 %s54, 1
      %p58 = scmp.eq.s32.totalorder %s20, 1
      %p59 = scmp.ne.s32.totalorder %s54, %s56
      %p60 = scmp.eq.s32.totalorder %s20, 0
      %p61 = por %p59, %p60
      %p62 = scmp.ne.s32.totalorder %s54, %s56
      %p63 = scmp.eq.s32.totalorder %s25, 1
      %p64 = por %p62, %p63
      %p65 = scmp.ne.s32.totalorder %s56, %s57
      %p66 = scmp.eq.s32.totalorder %s25, 0
      %p67 = por %p65, %p66
      %p68 = scmp.ne.s32.totalorder %s56, %s57
      %p69 = scmp.eq.s32.totalorder %s26, 1
      %p70 = por %p68, %p69
      %p72 = scmp.ne.s32.totalorder %s57, %s71
      %p73 = scmp.eq.s32.totalorder %s26, 0
      %p74 = por %p72, %p73
      %s76 = sadd.s32 %s75, 1
      %p79 = scmp.eq.s32.totalorder %s20, 1
      %p80 = scmp.ne.s32.totalorder %s75, %s77
      %p81 = scmp.eq.s32.totalorder %s20, 0
      %p82 = por %p80, %p81
      %p83 = scmp.ne.s32.totalorder %s75, %s77
      %p84 = scmp.eq.s32.totalorder %s25, 1
      %p85 = por %p83, %p84
      %p86 = scmp.ne.s32.totalorder %s77, %s78
      %p87 = scmp.eq.s32.totalorder %s25, 0
      %p88 = por %p86, %p87
      %p89 = scmp.ne.s32.totalorder %s77, %s78
      %p90 = scmp.eq.s32.totalorder %s26, 1
      %p91 = por %p89, %p90
      %p93 = scmp.ne.s32.totalorder %s78, %s92
      %p94 = scmp.eq.s32.totalorder %s26, 0
      %p95 = por %p93, %p94
      %s97 = sadd.s32 %s96, 1
      %p100 = scmp.eq.s32.totalorder %s20, 1
      %p101 = scmp.ne.s32.totalorder %s96, %s98
      %p102 = scmp.eq.s32.totalorder %s20, 0
      %p103 = por %p101, %p102
      %p104 = scmp.ne.s32.totalorder %s96, %s98
      %p105 = scmp.eq.s32.totalorder %s25, 1
      %p106 = por %p104, %p105
      %p107 = scmp.ne.s32.totalorder %s98, %s99
      %p108 = scmp.eq.s32.totalorder %s25, 0
      %p109 = por %p107, %p108
      %p110 = scmp.ne.s32.totalorder %s98, %s99
      %p111 = scmp.eq.s32.totalorder %s26, 1
      %p112 = por %p110, %p111
      %p114 = scmp.ne.s32.totalorder %s99, %s113
      %p115 = scmp.eq.s32.totalorder %s26, 0
      %p116 = por %p114, %p115
      %s118 = sadd.s32 %s117, 1
      %p121 = scmp.eq.s32.totalorder %s20, 1
      %p122 = scmp.ne.s32.totalorder %s117, %s119
      %p123 = scmp.eq.s32.totalorder %s20, 0
      %p124 = por %p122, %p123
      %p125 = scmp.ne.s32.totalorder %s117, %s119
      %p126 = scmp.eq.s32.totalorder %s25, 1
      %p127 = por %p125, %p126
      %p128 = scmp.ne.s32.totalorder %s119, %s120
      %p129 = scmp.eq.s32.totalorder %s25, 0
      %p130 = por %p128, %p129
      %p131 = scmp.ne.s32.totalorder %s119, %s120
      %p132 = scmp.eq.s32.totalorder %s26, 1
      %p133 = por %p131, %p132
      %p135 = scmp.ne.s32.totalorder %s120, %s134
      %p136 = scmp.eq.s32.totalorder %s26, 0
      %p137 = por %p135, %p136
      %s139 = sadd.s32 %s138, 1
      %p142 = scmp.eq.s32.totalorder %s20, 1
      %p143 = scmp.ne.s32.totalorder %s138, %s140
      %p144 = scmp.eq.s32.totalorder %s20, 0
      %p145 = por %p143, %p144
      %p146 = scmp.ne.s32.totalorder %s138, %s140
      %p147 = scmp.eq.s32.totalorder %s25, 1
      %p148 = por %p146, %p147
      %p149 = scmp.ne.s32.totalorder %s140, %s141
      %p150 = scmp.eq.s32.totalorder %s25, 0
      %p151 = por %p149, %p150
      %p152 = scmp.ne.s32.totalorder %s140, %s141
      %p153 = scmp.eq.s32.totalorder %s26, 1
      %p154 = por %p152, %p153
      %p156 = scmp.ne.s32.totalorder %s141, %s155
      %p157 = scmp.eq.s32.totalorder %s26, 0
      %p158 = por %p156, %p157
      %s160 = sadd.s32 %s159, 1
      %p163 = scmp.eq.s32.totalorder %s20, 1
      %p164 = scmp.ne.s32.totalorder %s159, %s161
      %p165 = scmp.eq.s32.totalorder %s20, 0
      %p166 = por %p164, %p165
      %p167 = scmp.ne.s32.totalorder %s159, %s161
      %p168 = scmp.eq.s32.totalorder %s25, 1
      %p169 = por %p167, %p168
      %p170 = scmp.ne.s32.totalorder %s161, %s162
      %p171 = scmp.eq.s32.totalorder %s25, 0
      %p172 = por %p170, %p171
      %p173 = scmp.ne.s32.totalorder %s161, %s162
      %p174 = scmp.eq.s32.totalorder %s26, 1
      %p175 = por %p173, %p174
      %p177 = scmp.ne.s32.totalorder %s162, %s176
      %p178 = scmp.eq.s32.totalorder %s26, 0
      %p179 = por %p177, %p178
      %s180 = ssub.s32 %s20, %s27
      %p181 = scmp.eq.s32.totalorder %s180, 0
      %s183 = sadd.s32 %s182, 1
      %s184 = scalar_select %p181, %s182, %s183
      %p187 = pneg %p181
      %p188 = scmp.eq.s32.totalorder %s20, 1
      %p189 = por %p187, %p188
      %p190 = scmp.ne.s32.totalorder %s182, %s185
      %p191 = scmp.eq.s32.totalorder %s20, 0
      %p192 = por %p190, %p191
      %p193 = scmp.ne.s32.totalorder %s182, %s185
      %p194 = scmp.eq.s32.totalorder %s25, 1
      %p195 = por %p193, %p194
      %p196 = scmp.ne.s32.totalorder %s185, %s186
      %p197 = scmp.eq.s32.totalorder %s25, 0
      %p198 = por %p196, %p197
      %p199 = scmp.ne.s32.totalorder %s185, %s186
      %p200 = scmp.eq.s32.totalorder %s26, 1
      %p201 = por %p199, %p200
      %p203 = scmp.ne.s32.totalorder %s186, %s202
      %p204 = scmp.eq.s32.totalorder %s26, 0
      %p205 = por %p203, %p204
      %p206 = scmp.le.s32.totalorder 1, %s20
      %p207 = scmp.lt.s32.totalorder %s20, 3
      %p208 = pnand %p206, %p207
      %p209 = pneg %p208
      // Predicated region
      $region9: #{tpu_custom_call.1} parent=5 // pred_check
        _
      $region10: #{tpu_custom_call.1} parent=5 // pred_check_branch
        %211 = sbr.rel (%p208) target = $region12
      $region11: #{tpu_custom_call.1} parent=5 // pred_region
        %s212 = ssub.s32 %s20, 1
        // Predicated region
        $region13: #{tpu_custom_call.1} parent=11 // pred_check
          %p213 = pneg %p67
        $region14: #{tpu_custom_call.1} parent=11 // pred_check_branch
          %215 = sbr.rel (%p213) target = $region16
        $region15: #{tpu_custom_call.1} parent=11 // pred_region
          %s217 = ssub.s32 512, 512
          %218 = vsyncadd [#allocation6], %s217
          %s219 = sshll.u32 [#allocation5], 4
          %s220 = int_to_ptr.vmem [resolvable:$true] %s219
          %225 = dma.hbm_to_vmem [thread:$0]  %s1, 512, %s220, [#allocation6], 64, 64, 4
        $region16: #{tpu_custom_call.1} parent=11 // pred_fallthru
          _
        // Predicated region
        $region17: #{tpu_custom_call.1} parent=11 // pred_check
          %p226 = pneg %p88
        $region18: #{tpu_custom_call.1} parent=11 // pred_check_branch
          %228 = sbr.rel (%p226) target = $region20
        $region19: #{tpu_custom_call.1} parent=11 // pred_region
          _
        $region20: #{tpu_custom_call.1} parent=11 // pred_fallthru
          _
        // Predicated region
        $region21: #{tpu_custom_call.1} parent=11 // pred_check
          %p229 = pneg %p109
        $region22: #{tpu_custom_call.1} parent=11 // pred_check_branch
          %231 = sbr.rel (%p229) target = $region24
        $region23: #{tpu_custom_call.1} parent=11 // pred_region
          %s233 = ssub.s32 256, 256
          %234 = vsyncadd [#allocation6], %s233
          %s235 = sshll.u32 [#allocation7], 4
          %s236 = int_to_ptr.vmem [resolvable:$true] %s235
          %241 = dma.hbm_to_vmem [thread:$0]  %s3, 256, %s236, [#allocation6], 128, 128, 8
        $region24: #{tpu_custom_call.1} parent=11 // pred_fallthru
          _
        // Predicated region
        $region25: #{tpu_custom_call.1} parent=11 // pred_check
          %p242 = pneg %p130
        $region26: #{tpu_custom_call.1} parent=11 // pred_check_branch
          %244 = sbr.rel (%p242) target = $region28
        $region27: #{tpu_custom_call.1} parent=11 // pred_region
          _
        $region28: #{tpu_custom_call.1} parent=11 // pred_fallthru
          _
        // Predicated region
        $region29: #{tpu_custom_call.1} parent=11 // pred_check
          %p245 = pneg %p151
        $region30: #{tpu_custom_call.1} parent=11 // pred_check_branch
          %247 = sbr.rel (%p245) target = $region32
        $region31: #{tpu_custom_call.1} parent=11 // pred_region
          _
        $region32: #{tpu_custom_call.1} parent=11 // pred_fallthru
          _
        // Predicated region
        $region33: #{tpu_custom_call.1} parent=11 // pred_check
          %p248 = pneg %p172
        $region34: #{tpu_custom_call.1} parent=11 // pred_check_branch
          %250 = sbr.rel (%p248) target = $region36
        $region35: #{tpu_custom_call.1} parent=11 // pred_region
          _
        $region36: #{tpu_custom_call.1} parent=11 // pred_fallthru
          _
      $region12: #{tpu_custom_call.1} parent=5 // pred_fallthru
        _
      %p251 = scmp.lt.s32.totalorder %s20, 2
      // Predicated region
      $region37: #{tpu_custom_call.1} parent=5 // pred_check
        %p252 = pneg %p251
      $region38: #{tpu_custom_call.1} parent=5 // pred_check_branch
        %254 = sbr.rel (%p252) target = $region40
      $region39: #{tpu_custom_call.1} parent=5 // pred_region
        // Predicated region
        $region41: #{tpu_custom_call.1} parent=39 // pred_check
          %p255 = pneg %p40
        $region42: #{tpu_custom_call.1} parent=39 // pred_check_branch
          %257 = sbr.rel (%p255) target = $region44
        $region43: #{tpu_custom_call.1} parent=39 // pred_region
          %s258 = sand.u32 %s30, 1
          %s259 = scalar_lea.sflag [#allocation3], %s258
          %s260 = sand.u32 %s30, 1
          %s261 = smul.addr %s260, 256
          %s262 = scalar_lea.vmem [#allocation2], %s261
          %s264 = ssub.s32 4096, 4096
          %265 = vsyncadd %s259, %s264
          %s266 = smul.addr %s20, 32
          %s267 = smul.addr %s266, 128
          %s268 = scalar_lea.hbm %s0, %s267
          %s269 = sshll.u32 %s262, 4
          %s270 = int_to_ptr.vmem [resolvable:$true] %s269
          %275 = dma.hbm_to_vmem [thread:$0]  %s268, 4096, %s270, %s259, 128, 128, 8
        $region44: #{tpu_custom_call.1} parent=39 // pred_fallthru
          _
      $region40: #{tpu_custom_call.1} parent=5 // pred_fallthru
        _
      %p276 = scmp.le.s32.totalorder 1, %s20
      %p277 = scmp.lt.s32.totalorder %s20, 3
      %p278 = pnand %p276, %p277
      %p279 = pneg %p278
      // Predicated region
      $region45: #{tpu_custom_call.1} parent=5 // pred_check
        _
      $region46: #{tpu_custom_call.1} parent=5 // pred_check_branch
        %281 = sbr.rel (%p278) target = $region48
      $region47: #{tpu_custom_call.1} parent=5 // pred_region
        %s282 = ssub.s32 %s20, 1
        %s283 = sand.u32 %s33, 1
        %s284 = scalar_lea.sflag [#allocation3], %s283
        %s285 = sand.u32 %s33, 1
        %s286 = smul.addr %s285, 256
        %s287 = scalar_lea.vmem [#allocation2], %s286
        // Predicated region
        $region49: #{tpu_custom_call.1} parent=47 // pred_check
          %p288 = pneg %p46
        $region50: #{tpu_custom_call.1} parent=47 // pred_check_branch
          %290 = sbr.rel (%p288) target = $region52
        $region51: #{tpu_custom_call.1} parent=47 // pred_region
          %291 = dma.done %s284, 4096
        $region52: #{tpu_custom_call.1} parent=47 // pred_fallthru
          _
        // Predicated region
        $region53: #{tpu_custom_call.1} parent=47 // pred_check
          %p292 = pneg %p67
        $region54: #{tpu_custom_call.1} parent=47 // pred_check_branch
          %294 = sbr.rel (%p292) target = $region56
        $region55: #{tpu_custom_call.1} parent=47 // pred_region
          %295 = dma.done [#allocation6], 512
        $region56: #{tpu_custom_call.1} parent=47 // pred_fallthru
          _
        // Predicated region
        $region57: #{tpu_custom_call.1} parent=47 // pred_check
          %p296 = pneg %p109
        $region58: #{tpu_custom_call.1} parent=47 // pred_check_branch
          %298 = sbr.rel (%p296) target = $region60
        $region59: #{tpu_custom_call.1} parent=47 // pred_region
          %299 = dma.done [#allocation6], 256
        $region60: #{tpu_custom_call.1} parent=47 // pred_fallthru
          _
        %s300 = sand.u32 %s33, 1
        %s301 = scalar_lea.sflag [#allocation3], %s300
        %s302 = sand.u32 %s33, 1
        %s303 = smul.addr %s302, 256
        %s304 = scalar_lea.vmem [#allocation2], %s303
        %p305 = pneg %p46
        %p306 = pneg %p43
        %p307 = pneg %p67
        %p308 = pneg %p64
        %p309 = pneg %p88
        %p310 = pneg %p85
        %p311 = pneg %p109
        %p312 = pneg %p106
        %p313 = pneg %p130
        %p314 = pneg %p127
        %p315 = pneg %p151
        %p316 = pneg %p148
        %p317 = pneg %p172
        %p318 = pneg %p169
        %p319 = pneg %p198
        %p320 = pneg %p195
        %s321 = sand.u32 %s185, 1
        %s322 = scalar_lea.sflag [#allocation4], %s321
        %s323 = sand.u32 %s185, 1
        %s324 = smul.addr %s323, 256
        %s325 = scalar_lea.vmem [#allocation8], %s324
        %v327 = vld [vmem:[%s287] sm:$0xff]
        %v328 = vld [vmem:[%s287 + $0x8] sm:$0xff]
        %v329 = vld [vmem:[%s287 + $0x10] sm:$0xff]
        %v330 = vld [vmem:[%s287 + $0x18] sm:$0xff]
        %v331 = vld [vmem:[%s287 + $0x20] sm:$0xff]
        %v332 = vld [vmem:[%s287 + $0x28] sm:$0xff]
        %v333 = vld [vmem:[%s287 + $0x30] sm:$0xff]
        %v334 = vld [vmem:[%s287 + $0x38] sm:$0xff]
        %v335 = vld [vmem:[%s287 + $0x40] sm:$0xff]
        %v336 = vld [vmem:[%s287 + $0x48] sm:$0xff]
        %v337 = vld [vmem:[%s287 + $0x50] sm:$0xff]
        %v338 = vld [vmem:[%s287 + $0x58] sm:$0xff]
        %v339 = vld [vmem:[%s287 + $0x60] sm:$0xff]
        %v340 = vld [vmem:[%s287 + $0x68] sm:$0xff]
        %v341 = vld [vmem:[%s287 + $0x70] sm:$0xff]
        %v342 = vld [vmem:[%s287 + $0x78] sm:$0xff]
        %v343 = vld [vmem:[%s287 + $0x80] sm:$0xff]
        %v344 = vld [vmem:[%s287 + $0x88] sm:$0xff]
        %v345 = vld [vmem:[%s287 + $0x90] sm:$0xff]
        %v346 = vld [vmem:[%s287 + $0x98] sm:$0xff]
        %v347 = vld [vmem:[%s287 + $0xa0] sm:$0xff]
        %v348 = vld [vmem:[%s287 + $0xa8] sm:$0xff]
        %v349 = vld [vmem:[%s287 + $0xb0] sm:$0xff]
        %v350 = vld [vmem:[%s287 + $0xb8] sm:$0xff]
        %v351 = vld [vmem:[%s287 + $0xc0] sm:$0xff]
        %v352 = vld [vmem:[%s287 + $0xc8] sm:$0xff]
        %v353 = vld [vmem:[%s287 + $0xd0] sm:$0xff]
        %v354 = vld [vmem:[%s287 + $0xd8] sm:$0xff]
        %v355 = vld [vmem:[%s287 + $0xe0] sm:$0xff]
        %v356 = vld [vmem:[%s287 + $0xe8] sm:$0xff]
        %v357 = vld [vmem:[%s287 + $0xf0] sm:$0xff]
        %v358 = vld [vmem:[%s287 + $0xf8] sm:$0xff]
        %v359 = vpack.c.bf16 %v328, %v327
        %v360 = vpack.c.bf16 %v330, %v329
        %v361 = vpack.c.bf16 %v332, %v331
        %v362 = vpack.c.bf16 %v334, %v333
        %v363 = vpack.c.bf16 %v336, %v335
        %v364 = vpack.c.bf16 %v338, %v337
        %v365 = vpack.c.bf16 %v340, %v339
        %v366 = vpack.c.bf16 %v342, %v341
        %v367 = vpack.c.bf16 %v344, %v343
        %v368 = vpack.c.bf16 %v346, %v345
        %v369 = vpack.c.bf16 %v348, %v347
        %v370 = vpack.c.bf16 %v350, %v349
        %v371 = vpack.c.bf16 %v352, %v351
        %v372 = vpack.c.bf16 %v354, %v353
        %v373 = vpack.c.bf16 %v356, %v355
        %v374 = vpack.c.bf16 %v358, %v357
        %v375 = vld [vmem:[#allocation5] sm:$0xf]
        %v376 = vld [vmem:[#allocation5 + $0x4] sm:$0xf]
        %v377 = vld [vmem:[#allocation5 + $0x8] sm:$0xf]
        %v378 = vld [vmem:[#allocation5 + $0xc] sm:$0xf]
        %v379 = vld [vmem:[#allocation5 + $0x10] sm:$0xf]
        %v380 = vld [vmem:[#allocation5 + $0x14] sm:$0xf]
        %v381 = vld [vmem:[#allocation5 + $0x18] sm:$0xf]
        %v382 = vld [vmem:[#allocation5 + $0x1c] sm:$0xf]
        %v383 = vld [vmem:[%s2] sm:$0x1]
        %v385 = vlaneseq
        %v386 = vshrl.u32 %v385, 7
        %v387 = vsub.s32 0, %v386
        %v388 = vrot.slane %v383, %v387
        %v398 = vunpack.c.l.b16 %v375
        %v399 = vunpack.c.l.b16 %v376
        %v400 = vunpack.c.l.b16 %v377
        %v401 = vunpack.c.l.b16 %v378
        %v402 = vunpack.c.l.b16 %v379
        %v403 = vunpack.c.l.b16 %v380
        %v404 = vunpack.c.l.b16 %v381
        %v405 = vunpack.c.l.b16 %v382
        %v406 = vpack.c.b16 %v399, %v398
        %v407 = vpack.c.b16 %v401, %v400
        %v408 = vpack.c.b16 %v403, %v402
        %v409 = vpack.c.b16 %v405, %v404
        %vm414 = vcmask 523264
        %v416 = vsel %vm414, %v359, 0
        %v419 = vsel %vm414, %v360, 0
        %v422 = vsel %vm414, %v361, 0
        %v425 = vsel %vm414, %v362, 0
        %v428 = vsel %vm414, %v363, 0
        %v431 = vsel %vm414, %v364, 0
        %v434 = vsel %vm414, %v365, 0
        %v437 = vsel %vm414, %v366, 0
        %v440 = vsel %vm414, %v367, 0
        %v443 = vsel %vm414, %v368, 0
        %v446 = vsel %vm414, %v369, 0
        %v449 = vsel %vm414, %v370, 0
        %v452 = vsel %vm414, %v371, 0
        %v455 = vsel %vm414, %v372, 0
        %v458 = vsel %vm414, %v373, 0
        %v461 = vsel %vm414, %v374, 0
        %463 = vmatprep.subr.bf16.mxu0 0
        %464 = vmatpush1.bf16.msra.mxu0 %v406
        %465 = vmatprep.subr.bf16.mxu0 0
        %466 = vmatpush1.bf16.msra.mxu0 %v407
        %467 = vmatprep.subr.bf16.mxu0 0
        %468 = vmatpush1.bf16.msra.mxu0 %v408
        %469 = vmatprep.subr.bf16.mxu0 0
        %470 = vmatpush1.bf16.msra.mxu0 %v409
        %471 = vmatprep.subr.bf16.mxu0 0
        %472 = vmatpush1.bf16.msra.mxu0 0
        %473 = vmatprep.subr.bf16.mxu0 0
        %474 = vmatpush1.bf16.msra.mxu0 0
        %475 = vmatprep.subr.bf16.mxu0 0
        %476 = vmatpush1.bf16.msra.mxu0 0
        %477 = vmatprep.subr.bf16.mxu0 0
        %478 = vmatpush1.bf16.msra.mxu0 0
        %479 = vmatprep.subr.bf16.mxu0 0
        %480 = vmatpush1.bf16.msra.mxu0 0
        %481 = vmatprep.subr.bf16.mxu0 0
        %482 = vmatpush1.bf16.msra.mxu0 0
        %483 = vmatprep.subr.bf16.mxu0 0
        %484 = vmatpush1.bf16.msra.mxu0 0
        %485 = vmatprep.subr.bf16.mxu0 0
        %486 = vmatpush1.bf16.msra.mxu0 0
        %487 = vmatprep.subr.bf16.mxu0 0
        %488 = vmatpush1.bf16.msra.mxu0 0
        %489 = vmatprep.subr.bf16.mxu0 0
        %490 = vmatpush1.bf16.msra.mxu0 0
        %491 = vmatprep.subr.bf16.mxu0 0
        %492 = vmatpush1.bf16.msra.mxu0 0
        %493 = vmatprep.subr.bf16.mxu0 0
        %494 = vmatpush1.bf16.msra.mxu0 0
        %495 = vmatprep.mubr.bf16.mxu0 0
        %496 = vmatmul.mubr.bf16.gmra.mrb[0].mxu0 %v416
        %v497 = vpop.f32.mrb[0].mxu0
        %v498 = vadd.f32 %v388, %v497
        %v499 = vpop.f32.mrb[0].mxu0
        %v500 = vpop.f32.mrb[0].mxu0
        %v501 = vadd.f32 %v388, %v500
        %v502 = vpop.f32.mrb[0].mxu0
        %503 = vmatprep.mubr.bf16.mxu0 0
        %504 = vmatmul.mubr.bf16.gmra.mrb[0].mxu0 %v419
        %v505 = vpop.f32.mrb[0].mxu0
        %v506 = vadd.f32 %v388, %v505
        %v507 = vpop.f32.mrb[0].mxu0
        %v508 = vpop.f32.mrb[0].mxu0
        %v509 = vadd.f32 %v388, %v508
        %v510 = vpop.f32.mrb[0].mxu0
        %511 = vmatprep.mubr.bf16.mxu0 0
        %512 = vmatmul.mubr.bf16.gmra.mrb[0].mxu0 %v422
        %v513 = vpop.f32.mrb[0].mxu0
        %v514 = vadd.f32 %v388, %v513
        %v515 = vpop.f32.mrb[0].mxu0
        %v516 = vpop.f32.mrb[0].mxu0
        %v517 = vadd.f32 %v388, %v516
        %v518 = vpop.f32.mrb[0].mxu0
        %519 = vmatprep.mubr.bf16.mxu0 0
        %520 = vmatmul.mubr.bf16.gmra.mrb[0].mxu0 %v425
        %v521 = vpop.f32.mrb[0].mxu0
        %v522 = vadd.f32 %v388, %v521
        %v523 = vpop.f32.mrb[0].mxu0
        %v524 = vpop.f32.mrb[0].mxu0
        %v525 = vadd.f32 %v388, %v524
        %v526 = vpop.f32.mrb[0].mxu0
        %527 = vmatprep.mubr.bf16.mxu0 0
        %528 = vmatmul.mubr.bf16.gmra.mrb[0].mxu0 %v428
        %v529 = vpop.f32.mrb[0].mxu0
        %v530 = vadd.f32 %v388, %v529
        %v531 = vpop.f32.mrb[0].mxu0
        %v532 = vpop.f32.mrb[0].mxu0
        %v533 = vadd.f32 %v388, %v532
        %v534 = vpop.f32.mrb[0].mxu0
        %535 = vmatprep.mubr.bf16.mxu0 0
        %536 = vmatmul.mubr.bf16.gmra.mrb[0].mxu0 %v431
        %v537 = vpop.f32.mrb[0].mxu0
        %v538 = vadd.f32 %v388, %v537
        %v539 = vpop.f32.mrb[0].mxu0
        %v540 = vpop.f32.mrb[0].mxu0
        %v541 = vadd.f32 %v388, %v540
        %v542 = vpop.f32.mrb[0].mxu0
        %543 = vmatprep.mubr.bf16.mxu0 0
        %544 = vmatmul.mubr.bf16.gmra.mrb[0].mxu0 %v434
        %v545 = vpop.f32.mrb[0].mxu0
        %v546 = vadd.f32 %v388, %v545
        %v547 = vpop.f32.mrb[0].mxu0
        %v548 = vpop.f32.mrb[0].mxu0
        %v549 = vadd.f32 %v388, %v548
        %v550 = vpop.f32.mrb[0].mxu0
        %551 = vmatprep.mubr.bf16.mxu0 0
        %552 = vmatmul.mubr.bf16.gmra.mrb[0].mxu0 %v437
        %v553 = vpop.f32.mrb[0].mxu0
        %v554 = vadd.f32 %v388, %v553
        %v555 = vpop.f32.mrb[0].mxu0
        %v556 = vpop.f32.mrb[0].mxu0
        %v557 = vadd.f32 %v388, %v556
        %v558 = vpop.f32.mrb[0].mxu0
        %559 = vmatprep.mubr.bf16.mxu0 0
        %560 = vmatmul.mubr.bf16.gmra.mrb[0].mxu0 %v440
        %v561 = vpop.f32.mrb[0].mxu0
        %v562 = vadd.f32 %v388, %v561
        %v563 = vpop.f32.mrb[0].mxu0
        %v564 = vpop.f32.mrb[0].mxu0
        %v565 = vadd.f32 %v388, %v564
        %v566 = vpop.f32.mrb[0].mxu0
        %567 = vmatprep.mubr.bf16.mxu0 0
        %568 = vmatmul.mubr.bf16.gmra.mrb[0].mxu0 %v443
        %v569 = vpop.f32.mrb[0].mxu0
        %v570 = vadd.f32 %v388, %v569
        %v571 = vpop.f32.mrb[0].mxu0
        %v572 = vpop.f32.mrb[0].mxu0
        %v573 = vadd.f32 %v388, %v572
        %v574 = vpop.f32.mrb[0].mxu0
        %575 = vmatprep.mubr.bf16.mxu0 0
        %576 = vmatmul.mubr.bf16.gmra.mrb[0].mxu0 %v446
        %v577 = vpop.f32.mrb[0].mxu0
        %v578 = vadd.f32 %v388, %v577
        %v579 = vpop.f32.mrb[0].mxu0
        %v580 = vpop.f32.mrb[0].mxu0
        %v581 = vadd.f32 %v388, %v580
        %v582 = vpop.f32.mrb[0].mxu0
        %583 = vmatprep.mubr.bf16.mxu0 0
        %584 = vmatmul.mubr.bf16.gmra.mrb[0].mxu0 %v449
        %v585 = vpop.f32.mrb[0].mxu0
        %v586 = vadd.f32 %v388, %v585
        %v587 = vpop.f32.mrb[0].mxu0
        %v588 = vpop.f32.mrb[0].mxu0
        %v589 = vadd.f32 %v388, %v588
        %v590 = vpop.f32.mrb[0].mxu0
        %591 = vmatprep.mubr.bf16.mxu0 0
        %592 = vmatmul.mubr.bf16.gmra.mrb[0].mxu0 %v452
        %v593 = vpop.f32.mrb[0].mxu0
        %v594 = vadd.f32 %v388, %v593
        %v595 = vpop.f32.mrb[0].mxu0
        %v596 = vpop.f32.mrb[0].mxu0
        %v597 = vadd.f32 %v388, %v596
        %v598 = vpop.f32.mrb[0].mxu0
        %599 = vmatprep.mubr.bf16.mxu0 0
        %600 = vmatmul.mubr.bf16.gmra.mrb[0].mxu0 %v455
        %v601 = vpop.f32.mrb[0].mxu0
        %v602 = vadd.f32 %v388, %v601
        %v603 = vpop.f32.mrb[0].mxu0
        %v604 = vpop.f32.mrb[0].mxu0
        %v605 = vadd.f32 %v388, %v604
        %v606 = vpop.f32.mrb[0].mxu0
        %607 = vmatprep.mubr.bf16.mxu0 0
        %608 = vmatmul.mubr.bf16.gmra.mrb[0].mxu0 %v458
        %v609 = vpop.f32.mrb[0].mxu0
        %v610 = vadd.f32 %v388, %v609
        %v611 = vpop.f32.mrb[0].mxu0
        %v612 = vpop.f32.mrb[0].mxu0
        %v613 = vadd.f32 %v388, %v612
        %v614 = vpop.f32.mrb[0].mxu0
        %615 = vmatprep.mubr.bf16.mxu0 0
        %616 = vmatmul.mubr.bf16.gmra.mrb[0].mxu0 %v461
        %v617 = vpop.f32.mrb[0].mxu0
        %v618 = vadd.f32 %v388, %v617
        %v619 = vpop.f32.mrb[0].mxu0
        %v620 = vpop.f32.mrb[0].mxu0
        %v621 = vadd.f32 %v388, %v620
        %v622 = vpop.f32.mrb[0].mxu0
        %623 = vdwg.mxu0
        %v624 = vmax.f32 %v498, 0.0
        %v625 = vmax.f32 %v501, 0.0
        %v626 = vmax.f32 %v506, 0.0
        %v627 = vmax.f32 %v509, 0.0
        %v628 = vmax.f32 %v514, 0.0
        %v629 = vmax.f32 %v517, 0.0
        %v630 = vmax.f32 %v522, 0.0
        %v631 = vmax.f32 %v525, 0.0
        %v632 = vmax.f32 %v530, 0.0
        %v633 = vmax.f32 %v533, 0.0
        %v634 = vmax.f32 %v538, 0.0
        %v635 = vmax.f32 %v541, 0.0
        %v636 = vmax.f32 %v546, 0.0
        %v637 = vmax.f32 %v549, 0.0
        %v638 = vmax.f32 %v554, 0.0
        %v639 = vmax.f32 %v557, 0.0
        %v640 = vmax.f32 %v562, 0.0
        %v641 = vmax.f32 %v565, 0.0
        %v642 = vmax.f32 %v570, 0.0
        %v643 = vmax.f32 %v573, 0.0
        %v644 = vmax.f32 %v578, 0.0
        %v645 = vmax.f32 %v581, 0.0
        %v646 = vmax.f32 %v586, 0.0
        %v647 = vmax.f32 %v589, 0.0
        %v648 = vmax.f32 %v594, 0.0
        %v649 = vmax.f32 %v597, 0.0
        %v650 = vmax.f32 %v602, 0.0
        %v651 = vmax.f32 %v605, 0.0
        %v652 = vmax.f32 %v610, 0.0
        %v653 = vmax.f32 %v613, 0.0
        %v654 = vmax.f32 %v618, 0.0
        %v655 = vmax.f32 %v621, 0.0
        %v656 = vld [vmem:[#allocation7] sm:$0xff]
        %v657 = vld [vmem:[#allocation7 + $0x8] sm:$0x1]
        %vm690 = vcmask 1040384
        %v691 = vrot.slane %v624, 7
        %v692 = vrot.slane %v625, 7
        %v693 = vsel %vm690, %v691, %v692
        %v694 = vrot.slane %v626, 7
        %v695 = vrot.slane %v627, 7
        %v696 = vsel %vm690, %v694, %v695
        %v697 = vrot.slane %v628, 7
        %v698 = vrot.slane %v629, 7
        %v699 = vsel %vm690, %v697, %v698
        %v700 = vrot.slane %v630, 7
        %v701 = vrot.slane %v631, 7
        %v702 = vsel %vm690, %v700, %v701
        %v703 = vrot.slane %v632, 7
        %v704 = vrot.slane %v633, 7
        %v705 = vsel %vm690, %v703, %v704
        %v706 = vrot.slane %v634, 7
        %v707 = vrot.slane %v635, 7
        %v708 = vsel %vm690, %v706, %v707
        %v709 = vrot.slane %v636, 7
        %v710 = vrot.slane %v637, 7
        %v711 = vsel %vm690, %v709, %v710
        %v712 = vrot.slane %v638, 7
        %v713 = vrot.slane %v639, 7
        %v714 = vsel %vm690, %v712, %v713
        %v715 = vrot.slane %v640, 7
        %v716 = vrot.slane %v641, 7
        %v717 = vsel %vm690, %v715, %v716
        %v718 = vrot.slane %v642, 7
        %v719 = vrot.slane %v643, 7
        %v720 = vsel %vm690, %v718, %v719
        %v721 = vrot.slane %v644, 7
        %v722 = vrot.slane %v645, 7
        %v723 = vsel %vm690, %v721, %v722
        %v724 = vrot.slane %v646, 7
        %v725 = vrot.slane %v647, 7
        %v726 = vsel %vm690, %v724, %v725
        %v727 = vrot.slane %v648, 7
        %v728 = vrot.slane %v649, 7
        %v729 = vsel %vm690, %v727, %v728
        %v730 = vrot.slane %v650, 7
        %v731 = vrot.slane %v651, 7
        %v732 = vsel %vm690, %v730, %v731
        %v733 = vrot.slane %v652, 7
        %v734 = vrot.slane %v653, 7
        %v735 = vsel %vm690, %v733, %v734
        %v736 = vrot.slane %v654, 7
        %v737 = vrot.slane %v655, 7
        %v738 = vsel %vm690, %v736, %v737
        %739 = vrot.lane.b32.xlu0 %v691, 64
        %v740 = vpop.permute.xlu0 %739
        %741 = vrot.lane.b32.xlu0 %v693, 64
        %v742 = vpop.permute.xlu0 %741
        %743 = vrot.lane.b32.xlu0 %v692, 64
        %v744 = vpop.permute.xlu0 %743
        %745 = vrot.lane.b32.xlu0 %v694, 64
        %v746 = vpop.permute.xlu0 %745
        %747 = vrot.lane.b32.xlu0 %v696, 64
        %v748 = vpop.permute.xlu0 %747
        %749 = vrot.lane.b32.xlu0 %v695, 64
        %v750 = vpop.permute.xlu0 %749
        %751 = vrot.lane.b32.xlu0 %v697, 64
        %v752 = vpop.permute.xlu0 %751
        %753 = vrot.lane.b32.xlu0 %v699, 64
        %v754 = vpop.permute.xlu0 %753
        %755 = vrot.lane.b32.xlu0 %v698, 64
        %v756 = vpop.permute.xlu0 %755
        %757 = vrot.lane.b32.xlu0 %v700, 64
        %v758 = vpop.permute.xlu0 %757
        %759 = vrot.lane.b32.xlu0 %v702, 64
        %v760 = vpop.permute.xlu0 %759
        %761 = vrot.lane.b32.xlu0 %v701, 64
        %v762 = vpop.permute.xlu0 %761
        %763 = vrot.lane.b32.xlu0 %v703, 64
        %v764 = vpop.permute.xlu0 %763
        %765 = vrot.lane.b32.xlu0 %v705, 64
        %v766 = vpop.permute.xlu0 %765
        %767 = vrot.lane.b32.xlu0 %v704, 64
        %v768 = vpop.permute.xlu0 %767
        %769 = vrot.lane.b32.xlu0 %v706, 64
        %v770 = vpop.permute.xlu0 %769
        %771 = vrot.lane.b32.xlu0 %v708, 64
        %v772 = vpop.permute.xlu0 %771
        %773 = vrot.lane.b32.xlu0 %v707, 64
        %v774 = vpop.permute.xlu0 %773
        %775 = vrot.lane.b32.xlu0 %v709, 64
        %v776 = vpop.permute.xlu0 %775
        %777 = vrot.lane.b32.xlu0 %v711, 64
        %v778 = vpop.permute.xlu0 %777
        %779 = vrot.lane.b32.xlu0 %v710, 64
        %v780 = vpop.permute.xlu0 %779
        %781 = vrot.lane.b32.xlu0 %v712, 64
        %v782 = vpop.permute.xlu0 %781
        %783 = vrot.lane.b32.xlu0 %v714, 64
        %v784 = vpop.permute.xlu0 %783
        %785 = vrot.lane.b32.xlu0 %v713, 64
        %v786 = vpop.permute.xlu0 %785
        %787 = vrot.lane.b32.xlu0 %v715, 64
        %v788 = vpop.permute.xlu0 %787
        %789 = vrot.lane.b32.xlu0 %v717, 64
        %v790 = vpop.permute.xlu0 %789
        %791 = vrot.lane.b32.xlu0 %v716, 64
        %v792 = vpop.permute.xlu0 %791
        %793 = vrot.lane.b32.xlu0 %v718, 64
        %v794 = vpop.permute.xlu0 %793
        %795 = vrot.lane.b32.xlu0 %v720, 64
        %v796 = vpop.permute.xlu0 %795
        %797 = vrot.lane.b32.xlu0 %v719, 64
        %v798 = vpop.permute.xlu0 %797
        %799 = vrot.lane.b32.xlu0 %v721, 64
        %v800 = vpop.permute.xlu0 %799
        %801 = vrot.lane.b32.xlu0 %v723, 64
        %v802 = vpop.permute.xlu0 %801
        %803 = vrot.lane.b32.xlu0 %v722, 64
        %v804 = vpop.permute.xlu0 %803
        %805 = vrot.lane.b32.xlu0 %v724, 64
        %v806 = vpop.permute.xlu0 %805
        %807 = vrot.lane.b32.xlu0 %v726, 64
        %v808 = vpop.permute.xlu0 %807
        %809 = vrot.lane.b32.xlu0 %v725, 64
        %v810 = vpop.permute.xlu0 %809
        %811 = vrot.lane.b32.xlu0 %v727, 64
        %v812 = vpop.permute.xlu0 %811
        %813 = vrot.lane.b32.xlu0 %v729, 64
        %v814 = vpop.permute.xlu0 %813
        %815 = vrot.lane.b32.xlu0 %v728, 64
        %v816 = vpop.permute.xlu0 %815
        %817 = vrot.lane.b32.xlu0 %v730, 64
        %v818 = vpop.permute.xlu0 %817
        %819 = vrot.lane.b32.xlu0 %v732, 64
        %v820 = vpop.permute.xlu0 %819
        %821 = vrot.lane.b32.xlu0 %v731, 64
        %v822 = vpop.permute.xlu0 %821
        %823 = vrot.lane.b32.xlu0 %v733, 64
        %v824 = vpop.permute.xlu0 %823
        %825 = vrot.lane.b32.xlu0 %v735, 64
        %v826 = vpop.permute.xlu0 %825
        %827 = vrot.lane.b32.xlu0 %v734, 64
        %v828 = vpop.permute.xlu0 %827
        %829 = vrot.lane.b32.xlu0 %v736, 64
        %v830 = vpop.permute.xlu0 %829
        %831 = vrot.lane.b32.xlu0 %v738, 64
        %v832 = vpop.permute.xlu0 %831
        %833 = vrot.lane.b32.xlu0 %v737, 64
        %v834 = vpop.permute.xlu0 %833
        %v883 = vsel %vm690, 0.0, %v740
        %v884 = vsel %vm690, 0.0, %v746
        %v885 = vsel %vm690, 0.0, %v752
        %v886 = vsel %vm690, 0.0, %v758
        %v887 = vsel %vm690, 0.0, %v764
        %v888 = vsel %vm690, 0.0, %v770
        %v889 = vsel %vm690, 0.0, %v776
        %v890 = vsel %vm690, 0.0, %v782
        %v891 = vsel %vm690, 0.0, %v788
        %v892 = vsel %vm690, 0.0, %v794
        %v893 = vsel %vm690, 0.0, %v800
        %v894 = vsel %vm690, 0.0, %v806
        %v895 = vsel %vm690, 0.0, %v812
        %v896 = vsel %vm690, 0.0, %v818
        %v897 = vsel %vm690, 0.0, %v824
        %v898 = vsel %vm690, 0.0, %v830
        %v899 = vsel %vm690, %v744, 0.0
        %v900 = vsel %vm690, %v750, 0.0
        %v901 = vsel %vm690, %v756, 0.0
        %v902 = vsel %vm690, %v762, 0.0
        %v903 = vsel %vm690, %v768, 0.0
        %v904 = vsel %vm690, %v774, 0.0
        %v905 = vsel %vm690, %v780, 0.0
        %v906 = vsel %vm690, %v786, 0.0
        %v907 = vsel %vm690, %v792, 0.0
        %v908 = vsel %vm690, %v798, 0.0
        %v909 = vsel %vm690, %v804, 0.0
        %v910 = vsel %vm690, %v810, 0.0
        %v911 = vsel %vm690, %v816, 0.0
        %v912 = vsel %vm690, %v822, 0.0
        %v913 = vsel %vm690, %v828, 0.0
        %v914 = vsel %vm690, %v834, 0.0
        %v915 = vlaneseq
        %v916 = vshrl.u32 %v915, 7
        %v917 = vsub.s32 4, %v916
        %v918 = vrot.slane %v656, %v917
        %920 = vrot.lane.b32.xlu0 %v918, 64
        %v921 = vpop.permute.xlu0 %920
        %v923 = vmul.f32 %v624, %v921
        %v924 = vmul.f32 %v625, %v921
        %v925 = vmul.f32 %v626, %v921
        %v926 = vmul.f32 %v627, %v921
        %v927 = vmul.f32 %v628, %v921
        %v928 = vmul.f32 %v629, %v921
        %v929 = vmul.f32 %v630, %v921
        %v930 = vmul.f32 %v631, %v921
        %v931 = vmul.f32 %v632, %v921
        %v932 = vmul.f32 %v633, %v921
        %v933 = vmul.f32 %v634, %v921
        %v934 = vmul.f32 %v635, %v921
        %v935 = vmul.f32 %v636, %v921
        %v936 = vmul.f32 %v637, %v921
        %v937 = vmul.f32 %v638, %v921
        %v938 = vmul.f32 %v639, %v921
        %v939 = vmul.f32 %v640, %v921
        %v940 = vmul.f32 %v641, %v921
        %v941 = vmul.f32 %v642, %v921
        %v942 = vmul.f32 %v643, %v921
        %v943 = vmul.f32 %v644, %v921
        %v944 = vmul.f32 %v645, %v921
        %v945 = vmul.f32 %v646, %v921
        %v946 = vmul.f32 %v647, %v921
        %v947 = vmul.f32 %v648, %v921
        %v948 = vmul.f32 %v649, %v921
        %v949 = vmul.f32 %v650, %v921
        %v950 = vmul.f32 %v651, %v921
        %v951 = vmul.f32 %v652, %v921
        %v952 = vmul.f32 %v653, %v921
        %v953 = vmul.f32 %v654, %v921
        %v954 = vmul.f32 %v655, %v921
        %v955 = vlaneseq
        %v956 = vshrl.u32 %v955, 7
        %v957 = vsub.s32 0, %v956
        %v958 = vrot.slane %v656, %v957
        %v959 = vmul.f32 %v958, 0.0
        %v960 = vmul.f32 %v883, %v958
        %v961 = vmul.f32 %v742, %v958
        %v962 = vmul.f32 %v884, %v958
        %v963 = vmul.f32 %v748, %v958
        %v964 = vmul.f32 %v885, %v958
        %v965 = vmul.f32 %v754, %v958
        %v966 = vmul.f32 %v886, %v958
        %v967 = vmul.f32 %v760, %v958
        %v968 = vmul.f32 %v887, %v958
        %v969 = vmul.f32 %v766, %v958
        %v970 = vmul.f32 %v888, %v958
        %v971 = vmul.f32 %v772, %v958
        %v972 = vmul.f32 %v889, %v958
        %v973 = vmul.f32 %v778, %v958
        %v974 = vmul.f32 %v890, %v958
        %v975 = vmul.f32 %v784, %v958
        %v976 = vmul.f32 %v891, %v958
        %v977 = vmul.f32 %v790, %v958
        %v978 = vmul.f32 %v892, %v958
        %v979 = vmul.f32 %v796, %v958
        %v980 = vmul.f32 %v893, %v958
        %v981 = vmul.f32 %v802, %v958
        %v982 = vmul.f32 %v894, %v958
        %v983 = vmul.f32 %v808, %v958
        %v984 = vmul.f32 %v895, %v958
        %v985 = vmul.f32 %v814, %v958
        %v986 = vmul.f32 %v896, %v958
        %v987 = vmul.f32 %v820, %v958
        %v988 = vmul.f32 %v897, %v958
        %v989 = vmul.f32 %v826, %v958
        %1021 = vrot.lane.b32.xlu0 %v959, 64
        %v1022 = vpop.permute.xlu0 %1021
        %1023 = vrot.lane.b32.xlu0 %v960, 64
        %v1024 = vpop.permute.xlu0 %1023
        %1025 = vrot.lane.b32.xlu0 %v961, 64
        %v1026 = vpop.permute.xlu0 %1025
        %1027 = vrot.lane.b32.xlu0 %v962, 64
        %v1028 = vpop.permute.xlu0 %1027
        %1029 = vrot.lane.b32.xlu0 %v963, 64
        %v1030 = vpop.permute.xlu0 %1029
        %1031 = vrot.lane.b32.xlu0 %v964, 64
        %v1032 = vpop.permute.xlu0 %1031
        %1033 = vrot.lane.b32.xlu0 %v965, 64
        %v1034 = vpop.permute.xlu0 %1033
        %1035 = vrot.lane.b32.xlu0 %v966, 64
        %v1036 = vpop.permute.xlu0 %1035
        %1037 = vrot.lane.b32.xlu0 %v967, 64
        %v1038 = vpop.permute.xlu0 %1037
        %1039 = vrot.lane.b32.xlu0 %v968, 64
        %v1040 = vpop.permute.xlu0 %1039
        %1041 = vrot.lane.b32.xlu0 %v969, 64
        %v1042 = vpop.permute.xlu0 %1041
        %1043 = vrot.lane.b32.xlu0 %v970, 64
        %v1044 = vpop.permute.xlu0 %1043
        %1045 = vrot.lane.b32.xlu0 %v971, 64
        %v1046 = vpop.permute.xlu0 %1045
        %1047 = vrot.lane.b32.xlu0 %v972, 64
        %v1048 = vpop.permute.xlu0 %1047
        %1049 = vrot.lane.b32.xlu0 %v973, 64
        %v1050 = vpop.permute.xlu0 %1049
        %1051 = vrot.lane.b32.xlu0 %v974, 64
        %v1052 = vpop.permute.xlu0 %1051
        %1053 = vrot.lane.b32.xlu0 %v975, 64
        %v1054 = vpop.permute.xlu0 %1053
        %1055 = vrot.lane.b32.xlu0 %v976, 64
        %v1056 = vpop.permute.xlu0 %1055
        %1057 = vrot.lane.b32.xlu0 %v977, 64
        %v1058 = vpop.permute.xlu0 %1057
        %1059 = vrot.lane.b32.xlu0 %v978, 64
        %v1060 = vpop.permute.xlu0 %1059
        %1061 = vrot.lane.b32.xlu0 %v979, 64
        %v1062 = vpop.permute.xlu0 %1061
        %1063 = vrot.lane.b32.xlu0 %v980, 64
        %v1064 = vpop.permute.xlu0 %1063
        %1065 = vrot.lane.b32.xlu0 %v981, 64
        %v1066 = vpop.permute.xlu0 %1065
        %1067 = vrot.lane.b32.xlu0 %v982, 64
        %v1068 = vpop.permute.xlu0 %1067
        %1069 = vrot.lane.b32.xlu0 %v983, 64
        %v1070 = vpop.permute.xlu0 %1069
        %1071 = vrot.lane.b32.xlu0 %v984, 64
        %v1072 = vpop.permute.xlu0 %1071
        %1073 = vrot.lane.b32.xlu0 %v985, 64
        %v1074 = vpop.permute.xlu0 %1073
        %1075 = vrot.lane.b32.xlu0 %v986, 64
        %v1076 = vpop.permute.xlu0 %1075
        %1077 = vrot.lane.b32.xlu0 %v987, 64
        %v1078 = vpop.permute.xlu0 %1077
        %1079 = vrot.lane.b32.xlu0 %v988, 64
        %v1080 = vpop.permute.xlu0 %1079
        %1081 = vrot.lane.b32.xlu0 %v989, 64
        %v1082 = vpop.permute.xlu0 %1081
        %v1114 = vadd.f32 %v923, %v1022
        %v1115 = vadd.f32 %v924, %v1022
        %v1116 = vadd.f32 %v925, %v1024
        %v1117 = vadd.f32 %v926, %v1026
        %v1118 = vadd.f32 %v927, %v1028
        %v1119 = vadd.f32 %v928, %v1030
        %v1120 = vadd.f32 %v929, %v1032
        %v1121 = vadd.f32 %v930, %v1034
        %v1122 = vadd.f32 %v931, %v1036
        %v1123 = vadd.f32 %v932, %v1038
        %v1124 = vadd.f32 %v933, %v1040
        %v1125 = vadd.f32 %v934, %v1042
        %v1126 = vadd.f32 %v935, %v1044
        %v1127 = vadd.f32 %v936, %v1046
        %v1128 = vadd.f32 %v937, %v1048
        %v1129 = vadd.f32 %v938, %v1050
        %v1130 = vadd.f32 %v939, %v1052
        %v1131 = vadd.f32 %v940, %v1054
        %v1132 = vadd.f32 %v941, %v1056
        %v1133 = vadd.f32 %v942, %v1058
        %v1134 = vadd.f32 %v943, %v1060
        %v1135 = vadd.f32 %v944, %v1062
        %v1136 = vadd.f32 %v945, %v1064
        %v1137 = vadd.f32 %v946, %v1066
        %v1138 = vadd.f32 %v947, %v1068
        %v1139 = vadd.f32 %v948, %v1070
        %v1140 = vadd.f32 %v949, %v1072
        %v1141 = vadd.f32 %v950, %v1074
        %v1142 = vadd.f32 %v951, %v1076
        %v1143 = vadd.f32 %v952, %v1078
        %v1144 = vadd.f32 %v953, %v1080
        %v1145 = vadd.f32 %v954, %v1082
        %v1146 = vlaneseq
        %v1147 = vshrl.u32 %v1146, 7
        %v1148 = vsub.s32 1, %v1147
        %v1149 = vrot.slane %v656, %v1148
        %v1150 = vmul.f32 %v1149, 0.0
        %v1151 = vmul.f32 %v883, %v1149
        %v1152 = vmul.f32 %v742, %v1149
        %v1153 = vmul.f32 %v899, %v1149
        %v1154 = vmul.f32 %v884, %v1149
        %v1155 = vmul.f32 %v748, %v1149
        %v1156 = vmul.f32 %v900, %v1149
        %v1157 = vmul.f32 %v885, %v1149
        %v1158 = vmul.f32 %v754, %v1149
        %v1159 = vmul.f32 %v901, %v1149
        %v1160 = vmul.f32 %v886, %v1149
        %v1161 = vmul.f32 %v760, %v1149
        %v1162 = vmul.f32 %v902, %v1149
        %v1163 = vmul.f32 %v887, %v1149
        %v1164 = vmul.f32 %v766, %v1149
        %v1165 = vmul.f32 %v903, %v1149
        %v1166 = vmul.f32 %v888, %v1149
        %v1167 = vmul.f32 %v772, %v1149
        %v1168 = vmul.f32 %v904, %v1149
        %v1169 = vmul.f32 %v889, %v1149
        %v1170 = vmul.f32 %v778, %v1149
        %v1171 = vmul.f32 %v905, %v1149
        %v1172 = vmul.f32 %v890, %v1149
        %v1173 = vmul.f32 %v784, %v1149
        %v1174 = vmul.f32 %v906, %v1149
        %v1175 = vmul.f32 %v891, %v1149
        %v1176 = vmul.f32 %v790, %v1149
        %v1177 = vmul.f32 %v907, %v1149
        %v1178 = vmul.f32 %v892, %v1149
        %v1179 = vmul.f32 %v796, %v1149
        %v1180 = vmul.f32 %v908, %v1149
        %v1181 = vmul.f32 %v893, %v1149
        %v1182 = vmul.f32 %v802, %v1149
        %v1183 = vmul.f32 %v909, %v1149
        %v1184 = vmul.f32 %v894, %v1149
        %v1185 = vmul.f32 %v808, %v1149
        %v1186 = vmul.f32 %v910, %v1149
        %v1187 = vmul.f32 %v895, %v1149
        %v1188 = vmul.f32 %v814, %v1149
        %v1189 = vmul.f32 %v911, %v1149
        %v1190 = vmul.f32 %v896, %v1149
        %v1191 = vmul.f32 %v820, %v1149
        %v1192 = vmul.f32 %v912, %v1149
        %v1193 = vmul.f32 %v897, %v1149
        %v1194 = vmul.f32 %v826, %v1149
        %v1195 = vmul.f32 %v913, %v1149
        %vm1242 = vcmask 1046528
        %v1243 = vrot.slane %v1150, 1
        %v1244 = vsel %vm1242, %v1243, %v1243
        %v1245 = vrot.slane %v1151, 1
        %v1246 = vrot.slane %v1152, 1
        %v1247 = vsel %vm1242, %v1245, %v1246
        %v1248 = vrot.slane %v1153, 1
        %v1249 = vsel %vm1242, %v1246, %v1248
        %v1250 = vrot.slane %v1154, 1
        %v1251 = vrot.slane %v1155, 1
        %v1252 = vsel %vm1242, %v1250, %v1251
        %v1253 = vrot.slane %v1156, 1
        %v1254 = vsel %vm1242, %v1251, %v1253
        %v1255 = vrot.slane %v1157, 1
        %v1256 = vrot.slane %v1158, 1
        %v1257 = vsel %vm1242, %v1255, %v1256
        %v1258 = vrot.slane %v1159, 1
        %v1259 = vsel %vm1242, %v1256, %v1258
        %v1260 = vrot.slane %v1160, 1
        %v1261 = vrot.slane %v1161, 1
        %v1262 = vsel %vm1242, %v1260, %v1261
        %v1263 = vrot.slane %v1162, 1
        %v1264 = vsel %vm1242, %v1261, %v1263
        %v1265 = vrot.slane %v1163, 1
        %v1266 = vrot.slane %v1164, 1
        %v1267 = vsel %vm1242, %v1265, %v1266
        %v1268 = vrot.slane %v1165, 1
        %v1269 = vsel %vm1242, %v1266, %v1268
        %v1270 = vrot.slane %v1166, 1
        %v1271 = vrot.slane %v1167, 1
        %v1272 = vsel %vm1242, %v1270, %v1271
        %v1273 = vrot.slane %v1168, 1
        %v1274 = vsel %vm1242, %v1271, %v1273
        %v1275 = vrot.slane %v1169, 1
        %v1276 = vrot.slane %v1170, 1
        %v1277 = vsel %vm1242, %v1275, %v1276
        %v1278 = vrot.slane %v1171, 1
        %v1279 = vsel %vm1242, %v1276, %v1278
        %v1280 = vrot.slane %v1172, 1
        %v1281 = vrot.slane %v1173, 1
        %v1282 = vsel %vm1242, %v1280, %v1281
        %v1283 = vrot.slane %v1174, 1
        %v1284 = vsel %vm1242, %v1281, %v1283
        %v1285 = vrot.slane %v1175, 1
        %v1286 = vrot.slane %v1176, 1
        %v1287 = vsel %vm1242, %v1285, %v1286
        %v1288 = vrot.slane %v1177, 1
        %v1289 = vsel %vm1242, %v1286, %v1288
        %v1290 = vrot.slane %v1178, 1
        %v1291 = vrot.slane %v1179, 1
        %v1292 = vsel %vm1242, %v1290, %v1291
        %v1293 = vrot.slane %v1180, 1
        %v1294 = vsel %vm1242, %v1291, %v1293
        %v1295 = vrot.slane %v1181, 1
        %v1296 = vrot.slane %v1182, 1
        %v1297 = vsel %vm1242, %v1295, %v1296
        %v1298 = vrot.slane %v1183, 1
        %v1299 = vsel %vm1242, %v1296, %v1298
        %v1300 = vrot.slane %v1184, 1
        %v1301 = vrot.slane %v1185, 1
        %v1302 = vsel %vm1242, %v1300, %v1301
        %v1303 = vrot.slane %v1186, 1
        %v1304 = vsel %vm1242, %v1301, %v1303
        %v1305 = vrot.slane %v1187, 1
        %v1306 = vrot.slane %v1188, 1
        %v1307 = vsel %vm1242, %v1305, %v1306
        %v1308 = vrot.slane %v1189, 1
        %v1309 = vsel %vm1242, %v1306, %v1308
        %v1310 = vrot.slane %v1190, 1
        %v1311 = vrot.slane %v1191, 1
        %v1312 = vsel %vm1242, %v1310, %v1311
        %v1313 = vrot.slane %v1192, 1
        %v1314 = vsel %vm1242, %v1311, %v1313
        %v1315 = vrot.slane %v1193, 1
        %v1316 = vrot.slane %v1194, 1
        %v1317 = vsel %vm1242, %v1315, %v1316
        %v1318 = vrot.slane %v1195, 1
        %v1319 = vsel %vm1242, %v1316, %v1318
        %1320 = vrot.lane.b32.xlu0 %v1244, 64
        %v1321 = vpop.permute.xlu0 %1320
        %1322 = vrot.lane.b32.xlu0 %v1247, 64
        %v1323 = vpop.permute.xlu0 %1322
        %1324 = vrot.lane.b32.xlu0 %v1249, 64
        %v1325 = vpop.permute.xlu0 %1324
        %1326 = vrot.lane.b32.xlu0 %v1252, 64
        %v1327 = vpop.permute.xlu0 %1326
        %1328 = vrot.lane.b32.xlu0 %v1254, 64
        %v1329 = vpop.permute.xlu0 %1328
        %1330 = vrot.lane.b32.xlu0 %v1257, 64
        %v1331 = vpop.permute.xlu0 %1330
        %1332 = vrot.lane.b32.xlu0 %v1259, 64
        %v1333 = vpop.permute.xlu0 %1332
        %1334 = vrot.lane.b32.xlu0 %v1262, 64
        %v1335 = vpop.permute.xlu0 %1334
        %1336 = vrot.lane.b32.xlu0 %v1264, 64
        %v1337 = vpop.permute.xlu0 %1336
        %1338 = vrot.lane.b32.xlu0 %v1267, 64
        %v1339 = vpop.permute.xlu0 %1338
        %1340 = vrot.lane.b32.xlu0 %v1269, 64
        %v1341 = vpop.permute.xlu0 %1340
        %1342 = vrot.lane.b32.xlu0 %v1272, 64
        %v1343 = vpop.permute.xlu0 %1342
        %1344 = vrot.lane.b32.xlu0 %v1274, 64
        %v1345 = vpop.permute.xlu0 %1344
        %1346 = vrot.lane.b32.xlu0 %v1277, 64
        %v1347 = vpop.permute.xlu0 %1346
        %1348 = vrot.lane.b32.xlu0 %v1279, 64
        %v1349 = vpop.permute.xlu0 %1348
        %1350 = vrot.lane.b32.xlu0 %v1282, 64
        %v1351 = vpop.permute.xlu0 %1350
        %1352 = vrot.lane.b32.xlu0 %v1284, 64
        %v1353 = vpop.permute.xlu0 %1352
        %1354 = vrot.lane.b32.xlu0 %v1287, 64
        %v1355 = vpop.permute.xlu0 %1354
        %1356 = vrot.lane.b32.xlu0 %v1289, 64
        %v1357 = vpop.permute.xlu0 %1356
        %1358 = vrot.lane.b32.xlu0 %v1292, 64
        %v1359 = vpop.permute.xlu0 %1358
        %1360 = vrot.lane.b32.xlu0 %v1294, 64
        %v1361 = vpop.permute.xlu0 %1360
        %1362 = vrot.lane.b32.xlu0 %v1297, 64
        %v1363 = vpop.permute.xlu0 %1362
        %1364 = vrot.lane.b32.xlu0 %v1299, 64
        %v1365 = vpop.permute.xlu0 %1364
        %1366 = vrot.lane.b32.xlu0 %v1302, 64
        %v1367 = vpop.permute.xlu0 %1366
        %1368 = vrot.lane.b32.xlu0 %v1304, 64
        %v1369 = vpop.permute.xlu0 %1368
        %1370 = vrot.lane.b32.xlu0 %v1307, 64
        %v1371 = vpop.permute.xlu0 %1370
        %1372 = vrot.lane.b32.xlu0 %v1309, 64
        %v1373 = vpop.permute.xlu0 %1372
        %1374 = vrot.lane.b32.xlu0 %v1312, 64
        %v1375 = vpop.permute.xlu0 %1374
        %1376 = vrot.lane.b32.xlu0 %v1314, 64
        %v1377 = vpop.permute.xlu0 %1376
        %1378 = vrot.lane.b32.xlu0 %v1317, 64
        %v1379 = vpop.permute.xlu0 %1378
        %1380 = vrot.lane.b32.xlu0 %v1319, 64
        %v1381 = vpop.permute.xlu0 %1380
        %v1413 = vadd.f32 %v1114, %v1321
        %v1414 = vadd.f32 %v1115, %v1321
        %v1415 = vadd.f32 %v1116, %v1323
        %v1416 = vadd.f32 %v1117, %v1325
        %v1417 = vadd.f32 %v1118, %v1327
        %v1418 = vadd.f32 %v1119, %v1329
        %v1419 = vadd.f32 %v1120, %v1331
        %v1420 = vadd.f32 %v1121, %v1333
        %v1421 = vadd.f32 %v1122, %v1335
        %v1422 = vadd.f32 %v1123, %v1337
        %v1423 = vadd.f32 %v1124, %v1339
        %v1424 = vadd.f32 %v1125, %v1341
        %v1425 = vadd.f32 %v1126, %v1343
        %v1426 = vadd.f32 %v1127, %v1345
        %v1427 = vadd.f32 %v1128, %v1347
        %v1428 = vadd.f32 %v1129, %v1349
        %v1429 = vadd.f32 %v1130, %v1351
        %v1430 = vadd.f32 %v1131, %v1353
        %v1431 = vadd.f32 %v1132, %v1355
        %v1432 = vadd.f32 %v1133, %v1357
        %v1433 = vadd.f32 %v1134, %v1359
        %v1434 = vadd.f32 %v1135, %v1361
        %v1435 = vadd.f32 %v1136, %v1363
        %v1436 = vadd.f32 %v1137, %v1365
        %v1437 = vadd.f32 %v1138, %v1367
        %v1438 = vadd.f32 %v1139, %v1369
        %v1439 = vadd.f32 %v1140, %v1371
        %v1440 = vadd.f32 %v1141, %v1373
        %v1441 = vadd.f32 %v1142, %v1375
        %v1442 = vadd.f32 %v1143, %v1377
        %v1443 = vadd.f32 %v1144, %v1379
        %v1444 = vadd.f32 %v1145, %v1381
        %v1445 = vlaneseq
        %v1446 = vshrl.u32 %v1445, 7
        %v1447 = vsub.s32 2, %v1446
        %v1448 = vrot.slane %v656, %v1447
        %v1449 = vmul.f32 %v1448, 0.0
        %v1450 = vmul.f32 %v883, %v1448
        %v1451 = vmul.f32 %v742, %v1448
        %v1452 = vmul.f32 %v899, %v1448
        %v1453 = vmul.f32 %v884, %v1448
        %v1454 = vmul.f32 %v748, %v1448
        %v1455 = vmul.f32 %v900, %v1448
        %v1456 = vmul.f32 %v885, %v1448
        %v1457 = vmul.f32 %v754, %v1448
        %v1458 = vmul.f32 %v901, %v1448
        %v1459 = vmul.f32 %v886, %v1448
        %v1460 = vmul.f32 %v760, %v1448
        %v1461 = vmul.f32 %v902, %v1448
        %v1462 = vmul.f32 %v887, %v1448
        %v1463 = vmul.f32 %v766, %v1448
        %v1464 = vmul.f32 %v903, %v1448
        %v1465 = vmul.f32 %v888, %v1448
        %v1466 = vmul.f32 %v772, %v1448
        %v1467 = vmul.f32 %v904, %v1448
        %v1468 = vmul.f32 %v889, %v1448
        %v1469 = vmul.f32 %v778, %v1448
        %v1470 = vmul.f32 %v905, %v1448
        %v1471 = vmul.f32 %v890, %v1448
        %v1472 = vmul.f32 %v784, %v1448
        %v1473 = vmul.f32 %v906, %v1448
        %v1474 = vmul.f32 %v891, %v1448
        %v1475 = vmul.f32 %v790, %v1448
        %v1476 = vmul.f32 %v907, %v1448
        %v1477 = vmul.f32 %v892, %v1448
        %v1478 = vmul.f32 %v796, %v1448
        %v1479 = vmul.f32 %v908, %v1448
        %v1480 = vmul.f32 %v893, %v1448
        %v1481 = vmul.f32 %v802, %v1448
        %v1482 = vmul.f32 %v909, %v1448
        %v1483 = vmul.f32 %v894, %v1448
        %v1484 = vmul.f32 %v808, %v1448
        %v1485 = vmul.f32 %v910, %v1448
        %v1486 = vmul.f32 %v895, %v1448
        %v1487 = vmul.f32 %v814, %v1448
        %v1488 = vmul.f32 %v911, %v1448
        %v1489 = vmul.f32 %v896, %v1448
        %v1490 = vmul.f32 %v820, %v1448
        %v1491 = vmul.f32 %v912, %v1448
        %v1492 = vmul.f32 %v897, %v1448
        %v1493 = vmul.f32 %v826, %v1448
        %v1494 = vmul.f32 %v913, %v1448
        %vm1541 = vcmask 1045504
        %v1542 = vrot.slane %v1449, 2
        %v1543 = vsel %vm1541, %v1542, %v1542
        %v1544 = vrot.slane %v1450, 2
        %v1545 = vrot.slane %v1451, 2
        %v1546 = vsel %vm1541, %v1544, %v1545
        %v1547 = vrot.slane %v1452, 2
        %v1548 = vsel %vm1541, %v1545, %v1547
        %v1549 = vrot.slane %v1453, 2
        %v1550 = vrot.slane %v1454, 2
        %v1551 = vsel %vm1541, %v1549, %v1550
        %v1552 = vrot.slane %v1455, 2
        %v1553 = vsel %vm1541, %v1550, %v1552
        %v1554 = vrot.slane %v1456, 2
        %v1555 = vrot.slane %v1457, 2
        %v1556 = vsel %vm1541, %v1554, %v1555
        %v1557 = vrot.slane %v1458, 2
        %v1558 = vsel %vm1541, %v1555, %v1557
        %v1559 = vrot.slane %v1459, 2
        %v1560 = vrot.slane %v1460, 2
        %v1561 = vsel %vm1541, %v1559, %v1560
        %v1562 = vrot.slane %v1461, 2
        %v1563 = vsel %vm1541, %v1560, %v1562
        %v1564 = vrot.slane %v1462, 2
        %v1565 = vrot.slane %v1463, 2
        %v1566 = vsel %vm1541, %v1564, %v1565
        %v1567 = vrot.slane %v1464, 2
        %v1568 = vsel %vm1541, %v1565, %v1567
        %v1569 = vrot.slane %v1465, 2
        %v1570 = vrot.slane %v1466, 2
        %v1571 = vsel %vm1541, %v1569, %v1570
        %v1572 = vrot.slane %v1467, 2
        %v1573 = vsel %vm1541, %v1570, %v1572
        %v1574 = vrot.slane %v1468, 2
        %v1575 = vrot.slane %v1469, 2
        %v1576 = vsel %vm1541, %v1574, %v1575
        %v1577 = vrot.slane %v1470, 2
        %v1578 = vsel %vm1541, %v1575, %v1577
        %v1579 = vrot.slane %v1471, 2
        %v1580 = vrot.slane %v1472, 2
        %v1581 = vsel %vm1541, %v1579, %v1580
        %v1582 = vrot.slane %v1473, 2
        %v1583 = vsel %vm1541, %v1580, %v1582
        %v1584 = vrot.slane %v1474, 2
        %v1585 = vrot.slane %v1475, 2
        %v1586 = vsel %vm1541, %v1584, %v1585
        %v1587 = vrot.slane %v1476, 2
        %v1588 = vsel %vm1541, %v1585, %v1587
        %v1589 = vrot.slane %v1477, 2
        %v1590 = vrot.slane %v1478, 2
        %v1591 = vsel %vm1541, %v1589, %v1590
        %v1592 = vrot.slane %v1479, 2
        %v1593 = vsel %vm1541, %v1590, %v1592
        %v1594 = vrot.slane %v1480, 2
        %v1595 = vrot.slane %v1481, 2
        %v1596 = vsel %vm1541, %v1594, %v1595
        %v1597 = vrot.slane %v1482, 2
        %v1598 = vsel %vm1541, %v1595, %v1597
        %v1599 = vrot.slane %v1483, 2
        %v1600 = vrot.slane %v1484, 2
        %v1601 = vsel %vm1541, %v1599, %v1600
        %v1602 = vrot.slane %v1485, 2
        %v1603 = vsel %vm1541, %v1600, %v1602
        %v1604 = vrot.slane %v1486, 2
        %v1605 = vrot.slane %v1487, 2
        %v1606 = vsel %vm1541, %v1604, %v1605
        %v1607 = vrot.slane %v1488, 2
        %v1608 = vsel %vm1541, %v1605, %v1607
        %v1609 = vrot.slane %v1489, 2
        %v1610 = vrot.slane %v1490, 2
        %v1611 = vsel %vm1541, %v1609, %v1610
        %v1612 = vrot.slane %v1491, 2
        %v1613 = vsel %vm1541, %v1610, %v1612
        %v1614 = vrot.slane %v1492, 2
        %v1615 = vrot.slane %v1493, 2
        %v1616 = vsel %vm1541, %v1614, %v1615
        %v1617 = vrot.slane %v1494, 2
        %v1618 = vsel %vm1541, %v1615, %v1617
        %1619 = vrot.lane.b32.xlu0 %v1543, 64
        %v1620 = vpop.permute.xlu0 %1619
        %1621 = vrot.lane.b32.xlu0 %v1546, 64
        %v1622 = vpop.permute.xlu0 %1621
        %1623 = vrot.lane.b32.xlu0 %v1548, 64
        %v1624 = vpop.permute.xlu0 %1623
        %1625 = vrot.lane.b32.xlu0 %v1551, 64
        %v1626 = vpop.permute.xlu0 %1625
        %1627 = vrot.lane.b32.xlu0 %v1553, 64
        %v1628 = vpop.permute.xlu0 %1627
        %1629 = vrot.lane.b32.xlu0 %v1556, 64
        %v1630 = vpop.permute.xlu0 %1629
        %1631 = vrot.lane.b32.xlu0 %v1558, 64
        %v1632 = vpop.permute.xlu0 %1631
        %1633 = vrot.lane.b32.xlu0 %v1561, 64
        %v1634 = vpop.permute.xlu0 %1633
        %1635 = vrot.lane.b32.xlu0 %v1563, 64
        %v1636 = vpop.permute.xlu0 %1635
        %1637 = vrot.lane.b32.xlu0 %v1566, 64
        %v1638 = vpop.permute.xlu0 %1637
        %1639 = vrot.lane.b32.xlu0 %v1568, 64
        %v1640 = vpop.permute.xlu0 %1639
        %1641 = vrot.lane.b32.xlu0 %v1571, 64
        %v1642 = vpop.permute.xlu0 %1641
        %1643 = vrot.lane.b32.xlu0 %v1573, 64
        %v1644 = vpop.permute.xlu0 %1643
        %1645 = vrot.lane.b32.xlu0 %v1576, 64
        %v1646 = vpop.permute.xlu0 %1645
        %1647 = vrot.lane.b32.xlu0 %v1578, 64
        %v1648 = vpop.permute.xlu0 %1647
        %1649 = vrot.lane.b32.xlu0 %v1581, 64
        %v1650 = vpop.permute.xlu0 %1649
        %1651 = vrot.lane.b32.xlu0 %v1583, 64
        %v1652 = vpop.permute.xlu0 %1651
        %1653 = vrot.lane.b32.xlu0 %v1586, 64
        %v1654 = vpop.permute.xlu0 %1653
        %1655 = vrot.lane.b32.xlu0 %v1588, 64
        %v1656 = vpop.permute.xlu0 %1655
        %1657 = vrot.lane.b32.xlu0 %v1591, 64
        %v1658 = vpop.permute.xlu0 %1657
        %1659 = vrot.lane.b32.xlu0 %v1593, 64
        %v1660 = vpop.permute.xlu0 %1659
        %1661 = vrot.lane.b32.xlu0 %v1596, 64
        %v1662 = vpop.permute.xlu0 %1661
        %1663 = vrot.lane.b32.xlu0 %v1598, 64
        %v1664 = vpop.permute.xlu0 %1663
        %1665 = vrot.lane.b32.xlu0 %v1601, 64
        %v1666 = vpop.permute.xlu0 %1665
        %1667 = vrot.lane.b32.xlu0 %v1603, 64
        %v1668 = vpop.permute.xlu0 %1667
        %1669 = vrot.lane.b32.xlu0 %v1606, 64
        %v1670 = vpop.permute.xlu0 %1669
        %1671 = vrot.lane.b32.xlu0 %v1608, 64
        %v1672 = vpop.permute.xlu0 %1671
        %1673 = vrot.lane.b32.xlu0 %v1611, 64
        %v1674 = vpop.permute.xlu0 %1673
        %1675 = vrot.lane.b32.xlu0 %v1613, 64
        %v1676 = vpop.permute.xlu0 %1675
        %1677 = vrot.lane.b32.xlu0 %v1616, 64
        %v1678 = vpop.permute.xlu0 %1677
        %1679 = vrot.lane.b32.xlu0 %v1618, 64
        %v1680 = vpop.permute.xlu0 %1679
        %v1712 = vadd.f32 %v1413, %v1620
        %v1713 = vadd.f32 %v1414, %v1620
        %v1714 = vadd.f32 %v1415, %v1622
        %v1715 = vadd.f32 %v1416, %v1624
        %v1716 = vadd.f32 %v1417, %v1626
        %v1717 = vadd.f32 %v1418, %v1628
        %v1718 = vadd.f32 %v1419, %v1630
        %v1719 = vadd.f32 %v1420, %v1632
        %v1720 = vadd.f32 %v1421, %v1634
        %v1721 = vadd.f32 %v1422, %v1636
        %v1722 = vadd.f32 %v1423, %v1638
        %v1723 = vadd.f32 %v1424, %v1640
        %v1724 = vadd.f32 %v1425, %v1642
        %v1725 = vadd.f32 %v1426, %v1644
        %v1726 = vadd.f32 %v1427, %v1646
        %v1727 = vadd.f32 %v1428, %v1648
        %v1728 = vadd.f32 %v1429, %v1650
        %v1729 = vadd.f32 %v1430, %v1652
        %v1730 = vadd.f32 %v1431, %v1654
        %v1731 = vadd.f32 %v1432, %v1656
        %v1732 = vadd.f32 %v1433, %v1658
        %v1733 = vadd.f32 %v1434, %v1660
        %v1734 = vadd.f32 %v1435, %v1662
        %v1735 = vadd.f32 %v1436, %v1664
        %v1736 = vadd.f32 %v1437, %v1666
        %v1737 = vadd.f32 %v1438, %v1668
        %v1738 = vadd.f32 %v1439, %v1670
        %v1739 = vadd.f32 %v1440, %v1672
        %v1740 = vadd.f32 %v1441, %v1674
        %v1741 = vadd.f32 %v1442, %v1676
        %v1742 = vadd.f32 %v1443, %v1678
        %v1743 = vadd.f32 %v1444, %v1680
        %v1744 = vlaneseq
        %v1745 = vshrl.u32 %v1744, 7
        %v1746 = vsub.s32 3, %v1745
        %v1747 = vrot.slane %v656, %v1746
        %v1748 = vmul.f32 %v883, %v1747
        %v1749 = vmul.f32 %v742, %v1747
        %v1750 = vmul.f32 %v884, %v1747
        %v1751 = vmul.f32 %v748, %v1747
        %v1752 = vmul.f32 %v885, %v1747
        %v1753 = vmul.f32 %v754, %v1747
        %v1754 = vmul.f32 %v886, %v1747
        %v1755 = vmul.f32 %v760, %v1747
        %v1756 = vmul.f32 %v887, %v1747
        %v1757 = vmul.f32 %v766, %v1747
        %v1758 = vmul.f32 %v888, %v1747
        %v1759 = vmul.f32 %v772, %v1747
        %v1760 = vmul.f32 %v889, %v1747
        %v1761 = vmul.f32 %v778, %v1747
        %v1762 = vmul.f32 %v890, %v1747
        %v1763 = vmul.f32 %v784, %v1747
        %v1764 = vmul.f32 %v891, %v1747
        %v1765 = vmul.f32 %v790, %v1747
        %v1766 = vmul.f32 %v892, %v1747
        %v1767 = vmul.f32 %v796, %v1747
        %v1768 = vmul.f32 %v893, %v1747
        %v1769 = vmul.f32 %v802, %v1747
        %v1770 = vmul.f32 %v894, %v1747
        %v1771 = vmul.f32 %v808, %v1747
        %v1772 = vmul.f32 %v895, %v1747
        %v1773 = vmul.f32 %v814, %v1747
        %v1774 = vmul.f32 %v896, %v1747
        %v1775 = vmul.f32 %v820, %v1747
        %v1776 = vmul.f32 %v897, %v1747
        %v1777 = vmul.f32 %v826, %v1747
        %v1778 = vmul.f32 %v898, %v1747
        %v1779 = vmul.f32 %v832, %v1747
        %1812 = vrot.lane.b32.xlu0 %v1748, 64
        %v1813 = vpop.permute.xlu0 %1812
        %1814 = vrot.lane.b32.xlu0 %v1749, 64
        %v1815 = vpop.permute.xlu0 %1814
        %1816 = vrot.lane.b32.xlu0 %v1750, 64
        %v1817 = vpop.permute.xlu0 %1816
        %1818 = vrot.lane.b32.xlu0 %v1751, 64
        %v1819 = vpop.permute.xlu0 %1818
        %1820 = vrot.lane.b32.xlu0 %v1752, 64
        %v1821 = vpop.permute.xlu0 %1820
        %1822 = vrot.lane.b32.xlu0 %v1753, 64
        %v1823 = vpop.permute.xlu0 %1822
        %1824 = vrot.lane.b32.xlu0 %v1754, 64
        %v1825 = vpop.permute.xlu0 %1824
        %1826 = vrot.lane.b32.xlu0 %v1755, 64
        %v1827 = vpop.permute.xlu0 %1826
        %1828 = vrot.lane.b32.xlu0 %v1756, 64
        %v1829 = vpop.permute.xlu0 %1828
        %1830 = vrot.lane.b32.xlu0 %v1757, 64
        %v1831 = vpop.permute.xlu0 %1830
        %1832 = vrot.lane.b32.xlu0 %v1758, 64
        %v1833 = vpop.permute.xlu0 %1832
        %1834 = vrot.lane.b32.xlu0 %v1759, 64
        %v1835 = vpop.permute.xlu0 %1834
        %1836 = vrot.lane.b32.xlu0 %v1760, 64
        %v1837 = vpop.permute.xlu0 %1836
        %1838 = vrot.lane.b32.xlu0 %v1761, 64
        %v1839 = vpop.permute.xlu0 %1838
        %1840 = vrot.lane.b32.xlu0 %v1762, 64
        %v1841 = vpop.permute.xlu0 %1840
        %1842 = vrot.lane.b32.xlu0 %v1763, 64
        %v1843 = vpop.permute.xlu0 %1842
        %1844 = vrot.lane.b32.xlu0 %v1764, 64
        %v1845 = vpop.permute.xlu0 %1844
        %1846 = vrot.lane.b32.xlu0 %v1765, 64
        %v1847 = vpop.permute.xlu0 %1846
        %1848 = vrot.lane.b32.xlu0 %v1766, 64
        %v1849 = vpop.permute.xlu0 %1848
        %1850 = vrot.lane.b32.xlu0 %v1767, 64
        %v1851 = vpop.permute.xlu0 %1850
        %1852 = vrot.lane.b32.xlu0 %v1768, 64
        %v1853 = vpop.permute.xlu0 %1852
        %1854 = vrot.lane.b32.xlu0 %v1769, 64
        %v1855 = vpop.permute.xlu0 %1854
        %1856 = vrot.lane.b32.xlu0 %v1770, 64
        %v1857 = vpop.permute.xlu0 %1856
        %1858 = vrot.lane.b32.xlu0 %v1771, 64
        %v1859 = vpop.permute.xlu0 %1858
        %1860 = vrot.lane.b32.xlu0 %v1772, 64
        %v1861 = vpop.permute.xlu0 %1860
        %1862 = vrot.lane.b32.xlu0 %v1773, 64
        %v1863 = vpop.permute.xlu0 %1862
        %1864 = vrot.lane.b32.xlu0 %v1774, 64
        %v1865 = vpop.permute.xlu0 %1864
        %1866 = vrot.lane.b32.xlu0 %v1775, 64
        %v1867 = vpop.permute.xlu0 %1866
        %1868 = vrot.lane.b32.xlu0 %v1776, 64
        %v1869 = vpop.permute.xlu0 %1868
        %1870 = vrot.lane.b32.xlu0 %v1777, 64
        %v1871 = vpop.permute.xlu0 %1870
        %1872 = vrot.lane.b32.xlu0 %v1778, 64
        %v1873 = vpop.permute.xlu0 %1872
        %1874 = vrot.lane.b32.xlu0 %v1779, 64
        %v1875 = vpop.permute.xlu0 %1874
        %v1908 = vadd.f32 %v1712, %v1813
        %v1909 = vadd.f32 %v1713, %v1815
        %v1910 = vadd.f32 %v1714, %v1817
        %v1911 = vadd.f32 %v1715, %v1819
        %v1912 = vadd.f32 %v1716, %v1821
        %v1913 = vadd.f32 %v1717, %v1823
        %v1914 = vadd.f32 %v1718, %v1825
        %v1915 = vadd.f32 %v1719, %v1827
        %v1916 = vadd.f32 %v1720, %v1829
        %v1917 = vadd.f32 %v1721, %v1831
        %v1918 = vadd.f32 %v1722, %v1833
        %v1919 = vadd.f32 %v1723, %v1835
        %v1920 = vadd.f32 %v1724, %v1837
        %v1921 = vadd.f32 %v1725, %v1839
        %v1922 = vadd.f32 %v1726, %v1841
        %v1923 = vadd.f32 %v1727, %v1843
        %v1924 = vadd.f32 %v1728, %v1845
        %v1925 = vadd.f32 %v1729, %v1847
        %v1926 = vadd.f32 %v1730, %v1849
        %v1927 = vadd.f32 %v1731, %v1851
        %v1928 = vadd.f32 %v1732, %v1853
        %v1929 = vadd.f32 %v1733, %v1855
        %v1930 = vadd.f32 %v1734, %v1857
        %v1931 = vadd.f32 %v1735, %v1859
        %v1932 = vadd.f32 %v1736, %v1861
        %v1933 = vadd.f32 %v1737, %v1863
        %v1934 = vadd.f32 %v1738, %v1865
        %v1935 = vadd.f32 %v1739, %v1867
        %v1936 = vadd.f32 %v1740, %v1869
        %v1937 = vadd.f32 %v1741, %v1871
        %v1938 = vadd.f32 %v1742, %v1873
        %v1939 = vadd.f32 %v1743, %v1875
        %v1940 = vlaneseq
        %v1941 = vshrl.u32 %v1940, 7
        %v1942 = vsub.s32 5, %v1941
        %v1943 = vrot.slane %v656, %v1942
        %v1944 = vmul.f32 %v883, %v1943
        %v1945 = vmul.f32 %v742, %v1943
        %v1946 = vmul.f32 %v899, %v1943
        %v1947 = vmul.f32 %v884, %v1943
        %v1948 = vmul.f32 %v748, %v1943
        %v1949 = vmul.f32 %v900, %v1943
        %v1950 = vmul.f32 %v885, %v1943
        %v1951 = vmul.f32 %v754, %v1943
        %v1952 = vmul.f32 %v901, %v1943
        %v1953 = vmul.f32 %v886, %v1943
        %v1954 = vmul.f32 %v760, %v1943
        %v1955 = vmul.f32 %v902, %v1943
        %v1956 = vmul.f32 %v887, %v1943
        %v1957 = vmul.f32 %v766, %v1943
        %v1958 = vmul.f32 %v903, %v1943
        %v1959 = vmul.f32 %v888, %v1943
        %v1960 = vmul.f32 %v772, %v1943
        %v1961 = vmul.f32 %v904, %v1943
        %v1962 = vmul.f32 %v889, %v1943
        %v1963 = vmul.f32 %v778, %v1943
        %v1964 = vmul.f32 %v905, %v1943
        %v1965 = vmul.f32 %v890, %v1943
        %v1966 = vmul.f32 %v784, %v1943
        %v1967 = vmul.f32 %v906, %v1943
        %v1968 = vmul.f32 %v891, %v1943
        %v1969 = vmul.f32 %v790, %v1943
        %v1970 = vmul.f32 %v907, %v1943
        %v1971 = vmul.f32 %v892, %v1943
        %v1972 = vmul.f32 %v796, %v1943
        %v1973 = vmul.f32 %v908, %v1943
        %v1974 = vmul.f32 %v893, %v1943
        %v1975 = vmul.f32 %v802, %v1943
        %v1976 = vmul.f32 %v909, %v1943
        %v1977 = vmul.f32 %v894, %v1943
        %v1978 = vmul.f32 %v808, %v1943
        %v1979 = vmul.f32 %v910, %v1943
        %v1980 = vmul.f32 %v895, %v1943
        %v1981 = vmul.f32 %v814, %v1943
        %v1982 = vmul.f32 %v911, %v1943
        %v1983 = vmul.f32 %v896, %v1943
        %v1984 = vmul.f32 %v820, %v1943
        %v1985 = vmul.f32 %v912, %v1943
        %v1986 = vmul.f32 %v897, %v1943
        %v1987 = vmul.f32 %v826, %v1943
        %v1988 = vmul.f32 %v913, %v1943
        %v1989 = vmul.f32 %v898, %v1943
        %v1990 = vmul.f32 %v832, %v1943
        %v1991 = vmul.f32 %v914, %v1943
        %v2040 = vrot.slane %v1944, 2
        %v2041 = vrot.slane %v1945, 2
        %v2042 = vsel %vm1541, %v2040, %v2041
        %v2043 = vrot.slane %v1946, 2
        %v2044 = vsel %vm1541, %v2041, %v2043
        %v2045 = vrot.slane %v1947, 2
        %v2046 = vrot.slane %v1948, 2
        %v2047 = vsel %vm1541, %v2045, %v2046
        %v2048 = vrot.slane %v1949, 2
        %v2049 = vsel %vm1541, %v2046, %v2048
        %v2050 = vrot.slane %v1950, 2
        %v2051 = vrot.slane %v1951, 2
        %v2052 = vsel %vm1541, %v2050, %v2051
        %v2053 = vrot.slane %v1952, 2
        %v2054 = vsel %vm1541, %v2051, %v2053
        %v2055 = vrot.slane %v1953, 2
        %v2056 = vrot.slane %v1954, 2
        %v2057 = vsel %vm1541, %v2055, %v2056
        %v2058 = vrot.slane %v1955, 2
        %v2059 = vsel %vm1541, %v2056, %v2058
        %v2060 = vrot.slane %v1956, 2
        %v2061 = vrot.slane %v1957, 2
        %v2062 = vsel %vm1541, %v2060, %v2061
        %v2063 = vrot.slane %v1958, 2
        %v2064 = vsel %vm1541, %v2061, %v2063
        %v2065 = vrot.slane %v1959, 2
        %v2066 = vrot.slane %v1960, 2
        %v2067 = vsel %vm1541, %v2065, %v2066
        %v2068 = vrot.slane %v1961, 2
        %v2069 = vsel %vm1541, %v2066, %v2068
        %v2070 = vrot.slane %v1962, 2
        %v2071 = vrot.slane %v1963, 2
        %v2072 = vsel %vm1541, %v2070, %v2071
        %v2073 = vrot.slane %v1964, 2
        %v2074 = vsel %vm1541, %v2071, %v2073
        %v2075 = vrot.slane %v1965, 2
        %v2076 = vrot.slane %v1966, 2
        %v2077 = vsel %vm1541, %v2075, %v2076
        %v2078 = vrot.slane %v1967, 2
        %v2079 = vsel %vm1541, %v2076, %v2078
        %v2080 = vrot.slane %v1968, 2
        %v2081 = vrot.slane %v1969, 2
        %v2082 = vsel %vm1541, %v2080, %v2081
        %v2083 = vrot.slane %v1970, 2
        %v2084 = vsel %vm1541, %v2081, %v2083
        %v2085 = vrot.slane %v1971, 2
        %v2086 = vrot.slane %v1972, 2
        %v2087 = vsel %vm1541, %v2085, %v2086
        %v2088 = vrot.slane %v1973, 2
        %v2089 = vsel %vm1541, %v2086, %v2088
        %v2090 = vrot.slane %v1974, 2
        %v2091 = vrot.slane %v1975, 2
        %v2092 = vsel %vm1541, %v2090, %v2091
        %v2093 = vrot.slane %v1976, 2
        %v2094 = vsel %vm1541, %v2091, %v2093
        %v2095 = vrot.slane %v1977, 2
        %v2096 = vrot.slane %v1978, 2
        %v2097 = vsel %vm1541, %v2095, %v2096
        %v2098 = vrot.slane %v1979, 2
        %v2099 = vsel %vm1541, %v2096, %v2098
        %v2100 = vrot.slane %v1980, 2
        %v2101 = vrot.slane %v1981, 2
        %v2102 = vsel %vm1541, %v2100, %v2101
        %v2103 = vrot.slane %v1982, 2
        %v2104 = vsel %vm1541, %v2101, %v2103
        %v2105 = vrot.slane %v1983, 2
        %v2106 = vrot.slane %v1984, 2
        %v2107 = vsel %vm1541, %v2105, %v2106
        %v2108 = vrot.slane %v1985, 2
        %v2109 = vsel %vm1541, %v2106, %v2108
        %v2110 = vrot.slane %v1986, 2
        %v2111 = vrot.slane %v1987, 2
        %v2112 = vsel %vm1541, %v2110, %v2111
        %v2113 = vrot.slane %v1988, 2
        %v2114 = vsel %vm1541, %v2111, %v2113
        %v2115 = vrot.slane %v1989, 2
        %v2116 = vrot.slane %v1990, 2
        %v2117 = vsel %vm1541, %v2115, %v2116
        %v2118 = vrot.slane %v1991, 2
        %v2119 = vsel %vm1541, %v2116, %v2118
        %2120 = vrot.lane.b32.xlu0 %v2042, 64
        %v2121 = vpop.permute.xlu0 %2120
        %2122 = vrot.lane.b32.xlu0 %v2044, 64
        %v2123 = vpop.permute.xlu0 %2122
        %2124 = vrot.lane.b32.xlu0 %v2047, 64
        %v2125 = vpop.permute.xlu0 %2124
        %2126 = vrot.lane.b32.xlu0 %v2049, 64
        %v2127 = vpop.permute.xlu0 %2126
        %2128 = vrot.lane.b32.xlu0 %v2052, 64
        %v2129 = vpop.permute.xlu0 %2128
        %2130 = vrot.lane.b32.xlu0 %v2054, 64
        %v2131 = vpop.permute.xlu0 %2130
        %2132 = vrot.lane.b32.xlu0 %v2057, 64
        %v2133 = vpop.permute.xlu0 %2132
        %2134 = vrot.lane.b32.xlu0 %v2059, 64
        %v2135 = vpop.permute.xlu0 %2134
        %2136 = vrot.lane.b32.xlu0 %v2062, 64
        %v2137 = vpop.permute.xlu0 %2136
        %2138 = vrot.lane.b32.xlu0 %v2064, 64
        %v2139 = vpop.permute.xlu0 %2138
        %2140 = vrot.lane.b32.xlu0 %v2067, 64
        %v2141 = vpop.permute.xlu0 %2140
        %2142 = vrot.lane.b32.xlu0 %v2069, 64
        %v2143 = vpop.permute.xlu0 %2142
        %2144 = vrot.lane.b32.xlu0 %v2072, 64
        %v2145 = vpop.permute.xlu0 %2144
        %2146 = vrot.lane.b32.xlu0 %v2074, 64
        %v2147 = vpop.permute.xlu0 %2146
        %2148 = vrot.lane.b32.xlu0 %v2077, 64
        %v2149 = vpop.permute.xlu0 %2148
        %2150 = vrot.lane.b32.xlu0 %v2079, 64
        %v2151 = vpop.permute.xlu0 %2150
        %2152 = vrot.lane.b32.xlu0 %v2082, 64
        %v2153 = vpop.permute.xlu0 %2152
        %2154 = vrot.lane.b32.xlu0 %v2084, 64
        %v2155 = vpop.permute.xlu0 %2154
        %2156 = vrot.lane.b32.xlu0 %v2087, 64
        %v2157 = vpop.permute.xlu0 %2156
        %2158 = vrot.lane.b32.xlu0 %v2089, 64
        %v2159 = vpop.permute.xlu0 %2158
        %2160 = vrot.lane.b32.xlu0 %v2092, 64
        %v2161 = vpop.permute.xlu0 %2160
        %2162 = vrot.lane.b32.xlu0 %v2094, 64
        %v2163 = vpop.permute.xlu0 %2162
        %2164 = vrot.lane.b32.xlu0 %v2097, 64
        %v2165 = vpop.permute.xlu0 %2164
        %2166 = vrot.lane.b32.xlu0 %v2099, 64
        %v2167 = vpop.permute.xlu0 %2166
        %2168 = vrot.lane.b32.xlu0 %v2102, 64
        %v2169 = vpop.permute.xlu0 %2168
        %2170 = vrot.lane.b32.xlu0 %v2104, 64
        %v2171 = vpop.permute.xlu0 %2170
        %2172 = vrot.lane.b32.xlu0 %v2107, 64
        %v2173 = vpop.permute.xlu0 %2172
        %2174 = vrot.lane.b32.xlu0 %v2109, 64
        %v2175 = vpop.permute.xlu0 %2174
        %2176 = vrot.lane.b32.xlu0 %v2112, 64
        %v2177 = vpop.permute.xlu0 %2176
        %2178 = vrot.lane.b32.xlu0 %v2114, 64
        %v2179 = vpop.permute.xlu0 %2178
        %2180 = vrot.lane.b32.xlu0 %v2117, 64
        %v2181 = vpop.permute.xlu0 %2180
        %2182 = vrot.lane.b32.xlu0 %v2119, 64
        %v2183 = vpop.permute.xlu0 %2182
        %v2216 = vadd.f32 %v1908, %v2121
        %v2217 = vadd.f32 %v1909, %v2123
        %v2218 = vadd.f32 %v1910, %v2125
        %v2219 = vadd.f32 %v1911, %v2127
        %v2220 = vadd.f32 %v1912, %v2129
        %v2221 = vadd.f32 %v1913, %v2131
        %v2222 = vadd.f32 %v1914, %v2133
        %v2223 = vadd.f32 %v1915, %v2135
        %v2224 = vadd.f32 %v1916, %v2137
        %v2225 = vadd.f32 %v1917, %v2139
        %v2226 = vadd.f32 %v1918, %v2141
        %v2227 = vadd.f32 %v1919, %v2143
        %v2228 = vadd.f32 %v1920, %v2145
        %v2229 = vadd.f32 %v1921, %v2147
        %v2230 = vadd.f32 %v1922, %v2149
        %v2231 = vadd.f32 %v1923, %v2151
        %v2232 = vadd.f32 %v1924, %v2153
        %v2233 = vadd.f32 %v1925, %v2155
        %v2234 = vadd.f32 %v1926, %v2157
        %v2235 = vadd.f32 %v1927, %v2159
        %v2236 = vadd.f32 %v1928, %v2161
        %v2237 = vadd.f32 %v1929, %v2163
        %v2238 = vadd.f32 %v1930, %v2165
        %v2239 = vadd.f32 %v1931, %v2167
        %v2240 = vadd.f32 %v1932, %v2169
        %v2241 = vadd.f32 %v1933, %v2171
        %v2242 = vadd.f32 %v1934, %v2173
        %v2243 = vadd.f32 %v1935, %v2175
        %v2244 = vadd.f32 %v1936, %v2177
        %v2245 = vadd.f32 %v1937, %v2179
        %v2246 = vadd.f32 %v1938, %v2181
        %v2247 = vadd.f32 %v1939, %v2183
        %v2248 = vlaneseq
        %v2249 = vshrl.u32 %v2248, 7
        %v2250 = vsub.s32 6, %v2249
        %v2251 = vrot.slane %v656, %v2250
        %v2252 = vmul.f32 %v884, %v2251
        %v2253 = vmul.f32 %v748, %v2251
        %v2254 = vmul.f32 %v885, %v2251
        %v2255 = vmul.f32 %v754, %v2251
        %v2256 = vmul.f32 %v886, %v2251
        %v2257 = vmul.f32 %v760, %v2251
        %v2258 = vmul.f32 %v887, %v2251
        %v2259 = vmul.f32 %v766, %v2251
        %v2260 = vmul.f32 %v888, %v2251
        %v2261 = vmul.f32 %v772, %v2251
        %v2262 = vmul.f32 %v889, %v2251
        %v2263 = vmul.f32 %v778, %v2251
        %v2264 = vmul.f32 %v890, %v2251
        %v2265 = vmul.f32 %v784, %v2251
        %v2266 = vmul.f32 %v891, %v2251
        %v2267 = vmul.f32 %v790, %v2251
        %v2268 = vmul.f32 %v892, %v2251
        %v2269 = vmul.f32 %v796, %v2251
        %v2270 = vmul.f32 %v893, %v2251
        %v2271 = vmul.f32 %v802, %v2251
        %v2272 = vmul.f32 %v894, %v2251
        %v2273 = vmul.f32 %v808, %v2251
        %v2274 = vmul.f32 %v895, %v2251
        %v2275 = vmul.f32 %v814, %v2251
        %v2276 = vmul.f32 %v896, %v2251
        %v2277 = vmul.f32 %v820, %v2251
        %v2278 = vmul.f32 %v897, %v2251
        %v2279 = vmul.f32 %v826, %v2251
        %v2280 = vmul.f32 %v898, %v2251
        %v2281 = vmul.f32 %v832, %v2251
        %v2282 = vmul.f32 %v2251, 0.0
        %2314 = vrot.lane.b32.xlu0 %v2252, 64
        %v2315 = vpop.permute.xlu0 %2314
        %2316 = vrot.lane.b32.xlu0 %v2253, 64
        %v2317 = vpop.permute.xlu0 %2316
        %2318 = vrot.lane.b32.xlu0 %v2254, 64
        %v2319 = vpop.permute.xlu0 %2318
        %2320 = vrot.lane.b32.xlu0 %v2255, 64
        %v2321 = vpop.permute.xlu0 %2320
        %2322 = vrot.lane.b32.xlu0 %v2256, 64
        %v2323 = vpop.permute.xlu0 %2322
        %2324 = vrot.lane.b32.xlu0 %v2257, 64
        %v2325 = vpop.permute.xlu0 %2324
        %2326 = vrot.lane.b32.xlu0 %v2258, 64
        %v2327 = vpop.permute.xlu0 %2326
        %2328 = vrot.lane.b32.xlu0 %v2259, 64
        %v2329 = vpop.permute.xlu0 %2328
        %2330 = vrot.lane.b32.xlu0 %v2260, 64
        %v2331 = vpop.permute.xlu0 %2330
        %2332 = vrot.lane.b32.xlu0 %v2261, 64
        %v2333 = vpop.permute.xlu0 %2332
        %2334 = vrot.lane.b32.xlu0 %v2262, 64
        %v2335 = vpop.permute.xlu0 %2334
        %2336 = vrot.lane.b32.xlu0 %v2263, 64
        %v2337 = vpop.permute.xlu0 %2336
        %2338 = vrot.lane.b32.xlu0 %v2264, 64
        %v2339 = vpop.permute.xlu0 %2338
        %2340 = vrot.lane.b32.xlu0 %v2265, 64
        %v2341 = vpop.permute.xlu0 %2340
        %2342 = vrot.lane.b32.xlu0 %v2266, 64
        %v2343 = vpop.permute.xlu0 %2342
        %2344 = vrot.lane.b32.xlu0 %v2267, 64
        %v2345 = vpop.permute.xlu0 %2344
        %2346 = vrot.lane.b32.xlu0 %v2268, 64
        %v2347 = vpop.permute.xlu0 %2346
        %2348 = vrot.lane.b32.xlu0 %v2269, 64
        %v2349 = vpop.permute.xlu0 %2348
        %2350 = vrot.lane.b32.xlu0 %v2270, 64
        %v2351 = vpop.permute.xlu0 %2350
        %2352 = vrot.lane.b32.xlu0 %v2271, 64
        %v2353 = vpop.permute.xlu0 %2352
        %2354 = vrot.lane.b32.xlu0 %v2272, 64
        %v2355 = vpop.permute.xlu0 %2354
        %2356 = vrot.lane.b32.xlu0 %v2273, 64
        %v2357 = vpop.permute.xlu0 %2356
        %2358 = vrot.lane.b32.xlu0 %v2274, 64
        %v2359 = vpop.permute.xlu0 %2358
        %2360 = vrot.lane.b32.xlu0 %v2275, 64
        %v2361 = vpop.permute.xlu0 %2360
        %2362 = vrot.lane.b32.xlu0 %v2276, 64
        %v2363 = vpop.permute.xlu0 %2362
        %2364 = vrot.lane.b32.xlu0 %v2277, 64
        %v2365 = vpop.permute.xlu0 %2364
        %2366 = vrot.lane.b32.xlu0 %v2278, 64
        %v2367 = vpop.permute.xlu0 %2366
        %2368 = vrot.lane.b32.xlu0 %v2279, 64
        %v2369 = vpop.permute.xlu0 %2368
        %2370 = vrot.lane.b32.xlu0 %v2280, 64
        %v2371 = vpop.permute.xlu0 %2370
        %2372 = vrot.lane.b32.xlu0 %v2281, 64
        %v2373 = vpop.permute.xlu0 %2372
        %2374 = vrot.lane.b32.xlu0 %v2282, 64
        %v2375 = vpop.permute.xlu0 %2374
        %v2407 = vadd.f32 %v2216, %v2315
        %v2408 = vadd.f32 %v2217, %v2317
        %v2409 = vadd.f32 %v2218, %v2319
        %v2410 = vadd.f32 %v2219, %v2321
        %v2411 = vadd.f32 %v2220, %v2323
        %v2412 = vadd.f32 %v2221, %v2325
        %v2413 = vadd.f32 %v2222, %v2327
        %v2414 = vadd.f32 %v2223, %v2329
        %v2415 = vadd.f32 %v2224, %v2331
        %v2416 = vadd.f32 %v2225, %v2333
        %v2417 = vadd.f32 %v2226, %v2335
        %v2418 = vadd.f32 %v2227, %v2337
        %v2419 = vadd.f32 %v2228, %v2339
        %v2420 = vadd.f32 %v2229, %v2341
        %v2421 = vadd.f32 %v2230, %v2343
        %v2422 = vadd.f32 %v2231, %v2345
        %v2423 = vadd.f32 %v2232, %v2347
        %v2424 = vadd.f32 %v2233, %v2349
        %v2425 = vadd.f32 %v2234, %v2351
        %v2426 = vadd.f32 %v2235, %v2353
        %v2427 = vadd.f32 %v2236, %v2355
        %v2428 = vadd.f32 %v2237, %v2357
        %v2429 = vadd.f32 %v2238, %v2359
        %v2430 = vadd.f32 %v2239, %v2361
        %v2431 = vadd.f32 %v2240, %v2363
        %v2432 = vadd.f32 %v2241, %v2365
        %v2433 = vadd.f32 %v2242, %v2367
        %v2434 = vadd.f32 %v2243, %v2369
        %v2435 = vadd.f32 %v2244, %v2371
        %v2436 = vadd.f32 %v2245, %v2373
        %v2437 = vadd.f32 %v2246, %v2375
        %v2438 = vadd.f32 %v2247, %v2375
        %v2439 = vlaneseq
        %v2440 = vshrl.u32 %v2439, 7
        %v2441 = vsub.s32 7, %v2440
        %v2442 = vrot.slane %v656, %v2441
        %v2443 = vmul.f32 %v884, %v2442
        %v2444 = vmul.f32 %v748, %v2442
        %v2445 = vmul.f32 %v900, %v2442
        %v2446 = vmul.f32 %v885, %v2442
        %v2447 = vmul.f32 %v754, %v2442
        %v2448 = vmul.f32 %v901, %v2442
        %v2449 = vmul.f32 %v886, %v2442
        %v2450 = vmul.f32 %v760, %v2442
        %v2451 = vmul.f32 %v902, %v2442
        %v2452 = vmul.f32 %v887, %v2442
        %v2453 = vmul.f32 %v766, %v2442
        %v2454 = vmul.f32 %v903, %v2442
        %v2455 = vmul.f32 %v888, %v2442
        %v2456 = vmul.f32 %v772, %v2442
        %v2457 = vmul.f32 %v904, %v2442
        %v2458 = vmul.f32 %v889, %v2442
        %v2459 = vmul.f32 %v778, %v2442
        %v2460 = vmul.f32 %v905, %v2442
        %v2461 = vmul.f32 %v890, %v2442
        %v2462 = vmul.f32 %v784, %v2442
        %v2463 = vmul.f32 %v906, %v2442
        %v2464 = vmul.f32 %v891, %v2442
        %v2465 = vmul.f32 %v790, %v2442
        %v2466 = vmul.f32 %v907, %v2442
        %v2467 = vmul.f32 %v892, %v2442
        %v2468 = vmul.f32 %v796, %v2442
        %v2469 = vmul.f32 %v908, %v2442
        %v2470 = vmul.f32 %v893, %v2442
        %v2471 = vmul.f32 %v802, %v2442
        %v2472 = vmul.f32 %v909, %v2442
        %v2473 = vmul.f32 %v894, %v2442
        %v2474 = vmul.f32 %v808, %v2442
        %v2475 = vmul.f32 %v910, %v2442
        %v2476 = vmul.f32 %v895, %v2442
        %v2477 = vmul.f32 %v814, %v2442
        %v2478 = vmul.f32 %v911, %v2442
        %v2479 = vmul.f32 %v896, %v2442
        %v2480 = vmul.f32 %v820, %v2442
        %v2481 = vmul.f32 %v912, %v2442
        %v2482 = vmul.f32 %v897, %v2442
        %v2483 = vmul.f32 %v826, %v2442
        %v2484 = vmul.f32 %v913, %v2442
        %v2485 = vmul.f32 %v898, %v2442
        %v2486 = vmul.f32 %v832, %v2442
        %v2487 = vmul.f32 %v914, %v2442
        %v2488 = vmul.f32 %v2442, 0.0
        %v2535 = vrot.slane %v2443, 1
        %v2536 = vrot.slane %v2444, 1
        %v2537 = vsel %vm1242, %v2535, %v2536
        %v2538 = vrot.slane %v2445, 1
        %v2539 = vsel %vm1242, %v2536, %v2538
        %v2540 = vrot.slane %v2446, 1
        %v2541 = vrot.slane %v2447, 1
        %v2542 = vsel %vm1242, %v2540, %v2541
        %v2543 = vrot.slane %v2448, 1
        %v2544 = vsel %vm1242, %v2541, %v2543
        %v2545 = vrot.slane %v2449, 1
        %v2546 = vrot.slane %v2450, 1
        %v2547 = vsel %vm1242, %v2545, %v2546
        %v2548 = vrot.slane %v2451, 1
        %v2549 = vsel %vm1242, %v2546, %v2548
        %v2550 = vrot.slane %v2452, 1
        %v2551 = vrot.slane %v2453, 1
        %v2552 = vsel %vm1242, %v2550, %v2551
        %v2553 = vrot.slane %v2454, 1
        %v2554 = vsel %vm1242, %v2551, %v2553
        %v2555 = vrot.slane %v2455, 1
        %v2556 = vrot.slane %v2456, 1
        %v2557 = vsel %vm1242, %v2555, %v2556
        %v2558 = vrot.slane %v2457, 1
        %v2559 = vsel %vm1242, %v2556, %v2558
        %v2560 = vrot.slane %v2458, 1
        %v2561 = vrot.slane %v2459, 1
        %v2562 = vsel %vm1242, %v2560, %v2561
        %v2563 = vrot.slane %v2460, 1
        %v2564 = vsel %vm1242, %v2561, %v2563
        %v2565 = vrot.slane %v2461, 1
        %v2566 = vrot.slane %v2462, 1
        %v2567 = vsel %vm1242, %v2565, %v2566
        %v2568 = vrot.slane %v2463, 1
        %v2569 = vsel %vm1242, %v2566, %v2568
        %v2570 = vrot.slane %v2464, 1
        %v2571 = vrot.slane %v2465, 1
        %v2572 = vsel %vm1242, %v2570, %v2571
        %v2573 = vrot.slane %v2466, 1
        %v2574 = vsel %vm1242, %v2571, %v2573
        %v2575 = vrot.slane %v2467, 1
        %v2576 = vrot.slane %v2468, 1
        %v2577 = vsel %vm1242, %v2575, %v2576
        %v2578 = vrot.slane %v2469, 1
        %v2579 = vsel %vm1242, %v2576, %v2578
        %v2580 = vrot.slane %v2470, 1
        %v2581 = vrot.slane %v2471, 1
        %v2582 = vsel %vm1242, %v2580, %v2581
        %v2583 = vrot.slane %v2472, 1
        %v2584 = vsel %vm1242, %v2581, %v2583
        %v2585 = vrot.slane %v2473, 1
        %v2586 = vrot.slane %v2474, 1
        %v2587 = vsel %vm1242, %v2585, %v2586
        %v2588 = vrot.slane %v2475, 1
        %v2589 = vsel %vm1242, %v2586, %v2588
        %v2590 = vrot.slane %v2476, 1
        %v2591 = vrot.slane %v2477, 1
        %v2592 = vsel %vm1242, %v2590, %v2591
        %v2593 = vrot.slane %v2478, 1
        %v2594 = vsel %vm1242, %v2591, %v2593
        %v2595 = vrot.slane %v2479, 1
        %v2596 = vrot.slane %v2480, 1
        %v2597 = vsel %vm1242, %v2595, %v2596
        %v2598 = vrot.slane %v2481, 1
        %v2599 = vsel %vm1242, %v2596, %v2598
        %v2600 = vrot.slane %v2482, 1
        %v2601 = vrot.slane %v2483, 1
        %v2602 = vsel %vm1242, %v2600, %v2601
        %v2603 = vrot.slane %v2484, 1
        %v2604 = vsel %vm1242, %v2601, %v2603
        %v2605 = vrot.slane %v2485, 1
        %v2606 = vrot.slane %v2486, 1
        %v2607 = vsel %vm1242, %v2605, %v2606
        %v2608 = vrot.slane %v2487, 1
        %v2609 = vsel %vm1242, %v2606, %v2608
        %v2610 = vrot.slane %v2488, 1
        %v2611 = vsel %vm1242, %v2610, %v2610
        %2612 = vrot.lane.b32.xlu0 %v2537, 64
        %v2613 = vpop.permute.xlu0 %2612
        %2614 = vrot.lane.b32.xlu0 %v2539, 64
        %v2615 = vpop.permute.xlu0 %2614
        %2616 = vrot.lane.b32.xlu0 %v2542, 64
        %v2617 = vpop.permute.xlu0 %2616
        %2618 = vrot.lane.b32.xlu0 %v2544, 64
        %v2619 = vpop.permute.xlu0 %2618
        %2620 = vrot.lane.b32.xlu0 %v2547, 64
        %v2621 = vpop.permute.xlu0 %2620
        %2622 = vrot.lane.b32.xlu0 %v2549, 64
        %v2623 = vpop.permute.xlu0 %2622
        %2624 = vrot.lane.b32.xlu0 %v2552, 64
        %v2625 = vpop.permute.xlu0 %2624
        %2626 = vrot.lane.b32.xlu0 %v2554, 64
        %v2627 = vpop.permute.xlu0 %2626
        %2628 = vrot.lane.b32.xlu0 %v2557, 64
        %v2629 = vpop.permute.xlu0 %2628
        %2630 = vrot.lane.b32.xlu0 %v2559, 64
        %v2631 = vpop.permute.xlu0 %2630
        %2632 = vrot.lane.b32.xlu0 %v2562, 64
        %v2633 = vpop.permute.xlu0 %2632
        %2634 = vrot.lane.b32.xlu0 %v2564, 64
        %v2635 = vpop.permute.xlu0 %2634
        %2636 = vrot.lane.b32.xlu0 %v2567, 64
        %v2637 = vpop.permute.xlu0 %2636
        %2638 = vrot.lane.b32.xlu0 %v2569, 64
        %v2639 = vpop.permute.xlu0 %2638
        %2640 = vrot.lane.b32.xlu0 %v2572, 64
        %v2641 = vpop.permute.xlu0 %2640
        %2642 = vrot.lane.b32.xlu0 %v2574, 64
        %v2643 = vpop.permute.xlu0 %2642
        %2644 = vrot.lane.b32.xlu0 %v2577, 64
        %v2645 = vpop.permute.xlu0 %2644
        %2646 = vrot.lane.b32.xlu0 %v2579, 64
        %v2647 = vpop.permute.xlu0 %2646
        %2648 = vrot.lane.b32.xlu0 %v2582, 64
        %v2649 = vpop.permute.xlu0 %2648
        %2650 = vrot.lane.b32.xlu0 %v2584, 64
        %v2651 = vpop.permute.xlu0 %2650
        %2652 = vrot.lane.b32.xlu0 %v2587, 64
        %v2653 = vpop.permute.xlu0 %2652
        %2654 = vrot.lane.b32.xlu0 %v2589, 64
        %v2655 = vpop.permute.xlu0 %2654
        %2656 = vrot.lane.b32.xlu0 %v2592, 64
        %v2657 = vpop.permute.xlu0 %2656
        %2658 = vrot.lane.b32.xlu0 %v2594, 64
        %v2659 = vpop.permute.xlu0 %2658
        %2660 = vrot.lane.b32.xlu0 %v2597, 64
        %v2661 = vpop.permute.xlu0 %2660
        %2662 = vrot.lane.b32.xlu0 %v2599, 64
        %v2663 = vpop.permute.xlu0 %2662
        %2664 = vrot.lane.b32.xlu0 %v2602, 64
        %v2665 = vpop.permute.xlu0 %2664
        %2666 = vrot.lane.b32.xlu0 %v2604, 64
        %v2667 = vpop.permute.xlu0 %2666
        %2668 = vrot.lane.b32.xlu0 %v2607, 64
        %v2669 = vpop.permute.xlu0 %2668
        %2670 = vrot.lane.b32.xlu0 %v2609, 64
        %v2671 = vpop.permute.xlu0 %2670
        %2672 = vrot.lane.b32.xlu0 %v2611, 64
        %v2673 = vpop.permute.xlu0 %2672
        %v2705 = vadd.f32 %v2407, %v2613
        %v2706 = vadd.f32 %v2408, %v2615
        %v2707 = vadd.f32 %v2409, %v2617
        %v2708 = vadd.f32 %v2410, %v2619
        %v2709 = vadd.f32 %v2411, %v2621
        %v2710 = vadd.f32 %v2412, %v2623
        %v2711 = vadd.f32 %v2413, %v2625
        %v2712 = vadd.f32 %v2414, %v2627
        %v2713 = vadd.f32 %v2415, %v2629
        %v2714 = vadd.f32 %v2416, %v2631
        %v2715 = vadd.f32 %v2417, %v2633
        %v2716 = vadd.f32 %v2418, %v2635
        %v2717 = vadd.f32 %v2419, %v2637
        %v2718 = vadd.f32 %v2420, %v2639
        %v2719 = vadd.f32 %v2421, %v2641
        %v2720 = vadd.f32 %v2422, %v2643
        %v2721 = vadd.f32 %v2423, %v2645
        %v2722 = vadd.f32 %v2424, %v2647
        %v2723 = vadd.f32 %v2425, %v2649
        %v2724 = vadd.f32 %v2426, %v2651
        %v2725 = vadd.f32 %v2427, %v2653
        %v2726 = vadd.f32 %v2428, %v2655
        %v2727 = vadd.f32 %v2429, %v2657
        %v2728 = vadd.f32 %v2430, %v2659
        %v2729 = vadd.f32 %v2431, %v2661
        %v2730 = vadd.f32 %v2432, %v2663
        %v2731 = vadd.f32 %v2433, %v2665
        %v2732 = vadd.f32 %v2434, %v2667
        %v2733 = vadd.f32 %v2435, %v2669
        %v2734 = vadd.f32 %v2436, %v2671
        %v2735 = vadd.f32 %v2437, %v2673
        %v2736 = vadd.f32 %v2438, %v2673
        %v2737 = vlaneseq
        %v2738 = vshrl.u32 %v2737, 7
        %v2739 = vsub.s32 0, %v2738
        %v2740 = vrot.slane %v657, %v2739
        %v2741 = vmul.f32 %v884, %v2740
        %v2742 = vmul.f32 %v748, %v2740
        %v2743 = vmul.f32 %v900, %v2740
        %v2744 = vmul.f32 %v885, %v2740
        %v2745 = vmul.f32 %v754, %v2740
        %v2746 = vmul.f32 %v901, %v2740
        %v2747 = vmul.f32 %v886, %v2740
        %v2748 = vmul.f32 %v760, %v2740
        %v2749 = vmul.f32 %v902, %v2740
        %v2750 = vmul.f32 %v887, %v2740
        %v2751 = vmul.f32 %v766, %v2740
        %v2752 = vmul.f32 %v903, %v2740
        %v2753 = vmul.f32 %v888, %v2740
        %v2754 = vmul.f32 %v772, %v2740
        %v2755 = vmul.f32 %v904, %v2740
        %v2756 = vmul.f32 %v889, %v2740
        %v2757 = vmul.f32 %v778, %v2740
        %v2758 = vmul.f32 %v905, %v2740
        %v2759 = vmul.f32 %v890, %v2740
        %v2760 = vmul.f32 %v784, %v2740
        %v2761 = vmul.f32 %v906, %v2740
        %v2762 = vmul.f32 %v891, %v2740
        %v2763 = vmul.f32 %v790, %v2740
        %v2764 = vmul.f32 %v907, %v2740
        %v2765 = vmul.f32 %v892, %v2740
        %v2766 = vmul.f32 %v796, %v2740
        %v2767 = vmul.f32 %v908, %v2740
        %v2768 = vmul.f32 %v893, %v2740
        %v2769 = vmul.f32 %v802, %v2740
        %v2770 = vmul.f32 %v909, %v2740
        %v2771 = vmul.f32 %v894, %v2740
        %v2772 = vmul.f32 %v808, %v2740
        %v2773 = vmul.f32 %v910, %v2740
        %v2774 = vmul.f32 %v895, %v2740
        %v2775 = vmul.f32 %v814, %v2740
        %v2776 = vmul.f32 %v911, %v2740
        %v2777 = vmul.f32 %v896, %v2740
        %v2778 = vmul.f32 %v820, %v2740
        %v2779 = vmul.f32 %v912, %v2740
        %v2780 = vmul.f32 %v897, %v2740
        %v2781 = vmul.f32 %v826, %v2740
        %v2782 = vmul.f32 %v913, %v2740
        %v2783 = vmul.f32 %v898, %v2740
        %v2784 = vmul.f32 %v832, %v2740
        %v2785 = vmul.f32 %v914, %v2740
        %v2786 = vmul.f32 %v2740, 0.0
        %v2833 = vrot.slane %v2741, 2
        %v2834 = vrot.slane %v2742, 2
        %v2835 = vsel %vm1541, %v2833, %v2834
        %v2836 = vrot.slane %v2743, 2
        %v2837 = vsel %vm1541, %v2834, %v2836
        %v2838 = vrot.slane %v2744, 2
        %v2839 = vrot.slane %v2745, 2
        %v2840 = vsel %vm1541, %v2838, %v2839
        %v2841 = vrot.slane %v2746, 2
        %v2842 = vsel %vm1541, %v2839, %v2841
        %v2843 = vrot.slane %v2747, 2
        %v2844 = vrot.slane %v2748, 2
        %v2845 = vsel %vm1541, %v2843, %v2844
        %v2846 = vrot.slane %v2749, 2
        %v2847 = vsel %vm1541, %v2844, %v2846
        %v2848 = vrot.slane %v2750, 2
        %v2849 = vrot.slane %v2751, 2
        %v2850 = vsel %vm1541, %v2848, %v2849
        %v2851 = vrot.slane %v2752, 2
        %v2852 = vsel %vm1541, %v2849, %v2851
        %v2853 = vrot.slane %v2753, 2
        %v2854 = vrot.slane %v2754, 2
        %v2855 = vsel %vm1541, %v2853, %v2854
        %v2856 = vrot.slane %v2755, 2
        %v2857 = vsel %vm1541, %v2854, %v2856
        %v2858 = vrot.slane %v2756, 2
        %v2859 = vrot.slane %v2757, 2
        %v2860 = vsel %vm1541, %v2858, %v2859
        %v2861 = vrot.slane %v2758, 2
        %v2862 = vsel %vm1541, %v2859, %v2861
        %v2863 = vrot.slane %v2759, 2
        %v2864 = vrot.slane %v2760, 2
        %v2865 = vsel %vm1541, %v2863, %v2864
        %v2866 = vrot.slane %v2761, 2
        %v2867 = vsel %vm1541, %v2864, %v2866
        %v2868 = vrot.slane %v2762, 2
        %v2869 = vrot.slane %v2763, 2
        %v2870 = vsel %vm1541, %v2868, %v2869
        %v2871 = vrot.slane %v2764, 2
        %v2872 = vsel %vm1541, %v2869, %v2871
        %v2873 = vrot.slane %v2765, 2
        %v2874 = vrot.slane %v2766, 2
        %v2875 = vsel %vm1541, %v2873, %v2874
        %v2876 = vrot.slane %v2767, 2
        %v2877 = vsel %vm1541, %v2874, %v2876
        %v2878 = vrot.slane %v2768, 2
        %v2879 = vrot.slane %v2769, 2
        %v2880 = vsel %vm1541, %v2878, %v2879
        %v2881 = vrot.slane %v2770, 2
        %v2882 = vsel %vm1541, %v2879, %v2881
        %v2883 = vrot.slane %v2771, 2
        %v2884 = vrot.slane %v2772, 2
        %v2885 = vsel %vm1541, %v2883, %v2884
        %v2886 = vrot.slane %v2773, 2
        %v2887 = vsel %vm1541, %v2884, %v2886
        %v2888 = vrot.slane %v2774, 2
        %v2889 = vrot.slane %v2775, 2
        %v2890 = vsel %vm1541, %v2888, %v2889
        %v2891 = vrot.slane %v2776, 2
        %v2892 = vsel %vm1541, %v2889, %v2891
        %v2893 = vrot.slane %v2777, 2
        %v2894 = vrot.slane %v2778, 2
        %v2895 = vsel %vm1541, %v2893, %v2894
        %v2896 = vrot.slane %v2779, 2
        %v2897 = vsel %vm1541, %v2894, %v2896
        %v2898 = vrot.slane %v2780, 2
        %v2899 = vrot.slane %v2781, 2
        %v2900 = vsel %vm1541, %v2898, %v2899
        %v2901 = vrot.slane %v2782, 2
        %v2902 = vsel %vm1541, %v2899, %v2901
        %v2903 = vrot.slane %v2783, 2
        %v2904 = vrot.slane %v2784, 2
        %v2905 = vsel %vm1541, %v2903, %v2904
        %v2906 = vrot.slane %v2785, 2
        %v2907 = vsel %vm1541, %v2904, %v2906
        %v2908 = vrot.slane %v2786, 2
        %v2909 = vsel %vm1541, %v2908, %v2908
        %2910 = vrot.lane.b32.xlu0 %v2835, 64
        %v2911 = vpop.permute.xlu0 %2910
        %2912 = vrot.lane.b32.xlu0 %v2837, 64
        %v2913 = vpop.permute.xlu0 %2912
        %2914 = vrot.lane.b32.xlu0 %v2840, 64
        %v2915 = vpop.permute.xlu0 %2914
        %2916 = vrot.lane.b32.xlu0 %v2842, 64
        %v2917 = vpop.permute.xlu0 %2916
        %2918 = vrot.lane.b32.xlu0 %v2845, 64
        %v2919 = vpop.permute.xlu0 %2918
        %2920 = vrot.lane.b32.xlu0 %v2847, 64
        %v2921 = vpop.permute.xlu0 %2920
        %2922 = vrot.lane.b32.xlu0 %v2850, 64
        %v2923 = vpop.permute.xlu0 %2922
        %2924 = vrot.lane.b32.xlu0 %v2852, 64
        %v2925 = vpop.permute.xlu0 %2924
        %2926 = vrot.lane.b32.xlu0 %v2855, 64
        %v2927 = vpop.permute.xlu0 %2926
        %2928 = vrot.lane.b32.xlu0 %v2857, 64
        %v2929 = vpop.permute.xlu0 %2928
        %2930 = vrot.lane.b32.xlu0 %v2860, 64
        %v2931 = vpop.permute.xlu0 %2930
        %2932 = vrot.lane.b32.xlu0 %v2862, 64
        %v2933 = vpop.permute.xlu0 %2932
        %2934 = vrot.lane.b32.xlu0 %v2865, 64
        %v2935 = vpop.permute.xlu0 %2934
        %2936 = vrot.lane.b32.xlu0 %v2867, 64
        %v2937 = vpop.permute.xlu0 %2936
        %2938 = vrot.lane.b32.xlu0 %v2870, 64
        %v2939 = vpop.permute.xlu0 %2938
        %2940 = vrot.lane.b32.xlu0 %v2872, 64
        %v2941 = vpop.permute.xlu0 %2940
        %2942 = vrot.lane.b32.xlu0 %v2875, 64
        %v2943 = vpop.permute.xlu0 %2942
        %2944 = vrot.lane.b32.xlu0 %v2877, 64
        %v2945 = vpop.permute.xlu0 %2944
        %2946 = vrot.lane.b32.xlu0 %v2880, 64
        %v2947 = vpop.permute.xlu0 %2946
        %2948 = vrot.lane.b32.xlu0 %v2882, 64
        %v2949 = vpop.permute.xlu0 %2948
        %2950 = vrot.lane.b32.xlu0 %v2885, 64
        %v2951 = vpop.permute.xlu0 %2950
        %2952 = vrot.lane.b32.xlu0 %v2887, 64
        %v2953 = vpop.permute.xlu0 %2952
        %2954 = vrot.lane.b32.xlu0 %v2890, 64
        %v2955 = vpop.permute.xlu0 %2954
        %2956 = vrot.lane.b32.xlu0 %v2892, 64
        %v2957 = vpop.permute.xlu0 %2956
        %2958 = vrot.lane.b32.xlu0 %v2895, 64
        %v2959 = vpop.permute.xlu0 %2958
        %2960 = vrot.lane.b32.xlu0 %v2897, 64
        %v2961 = vpop.permute.xlu0 %2960
        %2962 = vrot.lane.b32.xlu0 %v2900, 64
        %v2963 = vpop.permute.xlu0 %2962
        %2964 = vrot.lane.b32.xlu0 %v2902, 64
        %v2965 = vpop.permute.xlu0 %2964
        %2966 = vrot.lane.b32.xlu0 %v2905, 64
        %v2967 = vpop.permute.xlu0 %2966
        %2968 = vrot.lane.b32.xlu0 %v2907, 64
        %v2969 = vpop.permute.xlu0 %2968
        %2970 = vrot.lane.b32.xlu0 %v2909, 64
        %v2971 = vpop.permute.xlu0 %2970
        %v3003 = vadd.f32 %v2705, %v2911
        %v3004 = vadd.f32 %v2706, %v2913
        %v3005 = vadd.f32 %v2707, %v2915
        %v3006 = vadd.f32 %v2708, %v2917
        %v3007 = vadd.f32 %v2709, %v2919
        %v3008 = vadd.f32 %v2710, %v2921
        %v3009 = vadd.f32 %v2711, %v2923
        %v3010 = vadd.f32 %v2712, %v2925
        %v3011 = vadd.f32 %v2713, %v2927
        %v3012 = vadd.f32 %v2714, %v2929
        %v3013 = vadd.f32 %v2715, %v2931
        %v3014 = vadd.f32 %v2716, %v2933
        %v3015 = vadd.f32 %v2717, %v2935
        %v3016 = vadd.f32 %v2718, %v2937
        %v3017 = vadd.f32 %v2719, %v2939
        %v3018 = vadd.f32 %v2720, %v2941
        %v3019 = vadd.f32 %v2721, %v2943
        %v3020 = vadd.f32 %v2722, %v2945
        %v3021 = vadd.f32 %v2723, %v2947
        %v3022 = vadd.f32 %v2724, %v2949
        %v3023 = vadd.f32 %v2725, %v2951
        %v3024 = vadd.f32 %v2726, %v2953
        %v3025 = vadd.f32 %v2727, %v2955
        %v3026 = vadd.f32 %v2728, %v2957
        %v3027 = vadd.f32 %v2729, %v2959
        %v3028 = vadd.f32 %v2730, %v2961
        %v3029 = vadd.f32 %v2731, %v2963
        %v3030 = vadd.f32 %v2732, %v2965
        %v3031 = vadd.f32 %v2733, %v2967
        %v3032 = vadd.f32 %v2734, %v2969
        %v3033 = vadd.f32 %v2735, %v2971
        %v3034 = vadd.f32 %v2736, %v2971
        %v3035 = vld [vmem:[%s4] sm:$0x1]
        %v3037 = vlaneseq
        %v3038 = vshrl.u32 %v3037, 7
        %v3039 = vsub.s32 0, %v3038
        %v3040 = vrot.slane %v3035, %v3039
        %3041 = vrot.lane.b32.xlu0 %v3040, 64
        %v3042 = vpop.permute.xlu0 %3041
        %v3044 = vadd.f32 %v3003, %v3042
        %v3045 = vadd.f32 %v3004, %v3042
        %v3046 = vadd.f32 %v3005, %v3042
        %v3047 = vadd.f32 %v3006, %v3042
        %v3048 = vadd.f32 %v3007, %v3042
        %v3049 = vadd.f32 %v3008, %v3042
        %v3050 = vadd.f32 %v3009, %v3042
        %v3051 = vadd.f32 %v3010, %v3042
        %v3052 = vadd.f32 %v3011, %v3042
        %v3053 = vadd.f32 %v3012, %v3042
        %v3054 = vadd.f32 %v3013, %v3042
        %v3055 = vadd.f32 %v3014, %v3042
        %v3056 = vadd.f32 %v3015, %v3042
        %v3057 = vadd.f32 %v3016, %v3042
        %v3058 = vadd.f32 %v3017, %v3042
        %v3059 = vadd.f32 %v3018, %v3042
        %v3060 = vadd.f32 %v3019, %v3042
        %v3061 = vadd.f32 %v3020, %v3042
        %v3062 = vadd.f32 %v3021, %v3042
        %v3063 = vadd.f32 %v3022, %v3042
        %v3064 = vadd.f32 %v3023, %v3042
        %v3065 = vadd.f32 %v3024, %v3042
        %v3066 = vadd.f32 %v3025, %v3042
        %v3067 = vadd.f32 %v3026, %v3042
        %v3068 = vadd.f32 %v3027, %v3042
        %v3069 = vadd.f32 %v3028, %v3042
        %v3070 = vadd.f32 %v3029, %v3042
        %v3071 = vadd.f32 %v3030, %v3042
        %v3072 = vadd.f32 %v3031, %v3042
        %v3073 = vadd.f32 %v3032, %v3042
        %v3074 = vadd.f32 %v3033, %v3042
        %v3075 = vadd.f32 %v3034, %v3042
        %v3076 = vmax.f32 %v3044, 0.0
        %v3077 = vmax.f32 %v3045, 0.0
        %v3078 = vmax.f32 %v3046, 0.0
        %v3079 = vmax.f32 %v3047, 0.0
        %v3080 = vmax.f32 %v3048, 0.0
        %v3081 = vmax.f32 %v3049, 0.0
        %v3082 = vmax.f32 %v3050, 0.0
        %v3083 = vmax.f32 %v3051, 0.0
        %v3084 = vmax.f32 %v3052, 0.0
        %v3085 = vmax.f32 %v3053, 0.0
        %v3086 = vmax.f32 %v3054, 0.0
        %v3087 = vmax.f32 %v3055, 0.0
        %v3088 = vmax.f32 %v3056, 0.0
        %v3089 = vmax.f32 %v3057, 0.0
        %v3090 = vmax.f32 %v3058, 0.0
        %v3091 = vmax.f32 %v3059, 0.0
        %v3092 = vmax.f32 %v3060, 0.0
        %v3093 = vmax.f32 %v3061, 0.0
        %v3094 = vmax.f32 %v3062, 0.0
        %v3095 = vmax.f32 %v3063, 0.0
        %v3096 = vmax.f32 %v3064, 0.0
        %v3097 = vmax.f32 %v3065, 0.0
        %v3098 = vmax.f32 %v3066, 0.0
        %v3099 = vmax.f32 %v3067, 0.0
        %v3100 = vmax.f32 %v3068, 0.0
        %v3101 = vmax.f32 %v3069, 0.0
        %v3102 = vmax.f32 %v3070, 0.0
        %v3103 = vmax.f32 %v3071, 0.0
        %v3104 = vmax.f32 %v3072, 0.0
        %v3105 = vmax.f32 %v3073, 0.0
        %v3106 = vmax.f32 %v3074, 0.0
        %v3107 = vmax.f32 %v3075, 0.0
        %v3108 = vpack.c.bf16 %v3077, %v3076
        %v3109 = vpack.c.bf16 %v3079, %v3078
        %v3110 = vpack.c.bf16 %v3081, %v3080
        %v3111 = vpack.c.bf16 %v3083, %v3082
        %v3112 = vpack.c.bf16 %v3085, %v3084
        %v3113 = vpack.c.bf16 %v3087, %v3086
        %v3114 = vpack.c.bf16 %v3089, %v3088
        %v3115 = vpack.c.bf16 %v3091, %v3090
        %v3116 = vpack.c.bf16 %v3093, %v3092
        %v3117 = vpack.c.bf16 %v3095, %v3094
        %v3118 = vpack.c.bf16 %v3097, %v3096
        %v3119 = vpack.c.bf16 %v3099, %v3098
        %v3120 = vpack.c.bf16 %v3101, %v3100
        %v3121 = vpack.c.bf16 %v3103, %v3102
        %v3122 = vpack.c.bf16 %v3105, %v3104
        %v3123 = vpack.c.bf16 %v3107, %v3106
        %v3124 = vld [vmem:[%s5] sm:$0xf]
        %v3125 = vld [vmem:[%s5 + $0x4] sm:$0xf]
        %v3126 = vld [vmem:[%s5 + $0x8] sm:$0xf]
        %v3127 = vld [vmem:[%s5 + $0xc] sm:$0xf]
        %v3128 = vld [vmem:[%s6] sm:$0x1]
        %v3130 = vlaneseq
        %v3131 = vshrl.u32 %v3130, 7
        %v3132 = vsub.s32 0, %v3131
        %v3133 = vrot.slane %v3128, %v3132
        %3151 = vrot.lane.b32.xlu0 %v3108, 64
        %v3152 = vpop.permute.xlu0 %3151
        %3153 = vrot.lane.b32.xlu0 %v3109, 64
        %v3154 = vpop.permute.xlu0 %3153
        %3155 = vrot.lane.b32.xlu0 %v3110, 64
        %v3156 = vpop.permute.xlu0 %3155
        %3157 = vrot.lane.b32.xlu0 %v3111, 64
        %v3158 = vpop.permute.xlu0 %3157
        %3159 = vrot.lane.b32.xlu0 %v3112, 64
        %v3160 = vpop.permute.xlu0 %3159
        %3161 = vrot.lane.b32.xlu0 %v3113, 64
        %v3162 = vpop.permute.xlu0 %3161
        %3163 = vrot.lane.b32.xlu0 %v3114, 64
        %v3164 = vpop.permute.xlu0 %3163
        %3165 = vrot.lane.b32.xlu0 %v3115, 64
        %v3166 = vpop.permute.xlu0 %3165
        %3167 = vrot.lane.b32.xlu0 %v3116, 64
        %v3168 = vpop.permute.xlu0 %3167
        %3169 = vrot.lane.b32.xlu0 %v3117, 64
        %v3170 = vpop.permute.xlu0 %3169
        %3171 = vrot.lane.b32.xlu0 %v3118, 64
        %v3172 = vpop.permute.xlu0 %3171
        %3173 = vrot.lane.b32.xlu0 %v3119, 64
        %v3174 = vpop.permute.xlu0 %3173
        %3175 = vrot.lane.b32.xlu0 %v3120, 64
        %v3176 = vpop.permute.xlu0 %3175
        %3177 = vrot.lane.b32.xlu0 %v3121, 64
        %v3178 = vpop.permute.xlu0 %3177
        %3179 = vrot.lane.b32.xlu0 %v3122, 64
        %v3180 = vpop.permute.xlu0 %3179
        %3181 = vrot.lane.b32.xlu0 %v3123, 64
        %v3182 = vpop.permute.xlu0 %3181
        %v3187 = vunpack.c.l.b16 %v3124
        %v3188 = vunpack.c.l.b16 %v3125
        %v3189 = vunpack.c.l.b16 %v3126
        %v3190 = vunpack.c.l.b16 %v3127
        %v3191 = vpack.c.b16 %v3188, %v3187
        %v3192 = vpack.c.b16 %v3190, %v3189
        %vm3195 = vcmask 261120
        %v3197 = vsel %vm3195, %v3152, 0
        %v3200 = vsel %vm3195, %v3154, 0
        %v3203 = vsel %vm3195, %v3156, 0
        %v3206 = vsel %vm3195, %v3158, 0
        %v3209 = vsel %vm3195, %v3160, 0
        %v3212 = vsel %vm3195, %v3162, 0
        %v3215 = vsel %vm3195, %v3164, 0
        %v3218 = vsel %vm3195, %v3166, 0
        %v3221 = vsel %vm3195, %v3168, 0
        %v3224 = vsel %vm3195, %v3170, 0
        %v3227 = vsel %vm3195, %v3172, 0
        %v3230 = vsel %vm3195, %v3174, 0
        %v3233 = vsel %vm3195, %v3176, 0
        %v3236 = vsel %vm3195, %v3178, 0
        %v3239 = vsel %vm3195, %v3180, 0
        %v3242 = vsel %vm3195, %v3182, 0
        %3244 = vmatprep.subr.bf16.mxu0 0
        %3245 = vmatpush1.bf16.msra.mxu0 %v3191
        %3246 = vmatprep.subr.bf16.mxu0 0
        %3247 = vmatpush1.bf16.msra.mxu0 %v3192
        %3248 = vmatprep.subr.bf16.mxu0 0
        %3249 = vmatpush1.bf16.msra.mxu0 0
        %3250 = vmatprep.subr.bf16.mxu0 0
        %3251 = vmatpush1.bf16.msra.mxu0 0
        %3252 = vmatprep.subr.bf16.mxu0 0
        %3253 = vmatpush1.bf16.msra.mxu0 0
        %3254 = vmatprep.subr.bf16.mxu0 0
        %3255 = vmatpush1.bf16.msra.mxu0 0
        %3256 = vmatprep.subr.bf16.mxu0 0
        %3257 = vmatpush1.bf16.msra.mxu0 0
        %3258 = vmatprep.subr.bf16.mxu0 0
        %3259 = vmatpush1.bf16.msra.mxu0 0
        %3260 = vmatprep.subr.bf16.mxu0 0
        %3261 = vmatpush1.bf16.msra.mxu0 0
        %3262 = vmatprep.subr.bf16.mxu0 0
        %3263 = vmatpush1.bf16.msra.mxu0 0
        %3264 = vmatprep.subr.bf16.mxu0 0
        %3265 = vmatpush1.bf16.msra.mxu0 0
        %3266 = vmatprep.subr.bf16.mxu0 0
        %3267 = vmatpush1.bf16.msra.mxu0 0
        %3268 = vmatprep.subr.bf16.mxu0 0
        %3269 = vmatpush1.bf16.msra.mxu0 0
        %3270 = vmatprep.subr.bf16.mxu0 0
        %3271 = vmatpush1.bf16.msra.mxu0 0
        %3272 = vmatprep.subr.bf16.mxu0 0
        %3273 = vmatpush1.bf16.msra.mxu0 0
        %3274 = vmatprep.subr.bf16.mxu0 0
        %3275 = vmatpush1.bf16.msra.mxu0 0
        %3276 = vmatprep.mubr.bf16.mxu0 0
        %3277 = vmatmul.mubr.bf16.gmra.mrb[0].mxu0 %v3197
        %v3278 = vpop.f32.mrb[0].mxu0
        %v3279 = vadd.f32 %v3133, %v3278
        %v3280 = vpop.f32.mrb[0].mxu0
        %v3281 = vpop.f32.mrb[0].mxu0
        %v3282 = vadd.f32 %v3133, %v3281
        %v3283 = vpop.f32.mrb[0].mxu0
        %3284 = vmatprep.mubr.bf16.mxu0 0
        %3285 = vmatmul.mubr.bf16.gmra.mrb[0].mxu0 %v3200
        %v3286 = vpop.f32.mrb[0].mxu0
        %v3287 = vadd.f32 %v3133, %v3286
        %v3288 = vpop.f32.mrb[0].mxu0
        %v3289 = vpop.f32.mrb[0].mxu0
        %v3290 = vadd.f32 %v3133, %v3289
        %v3291 = vpop.f32.mrb[0].mxu0
        %3292 = vmatprep.mubr.bf16.mxu0 0
        %3293 = vmatmul.mubr.bf16.gmra.mrb[0].mxu0 %v3203
        %v3294 = vpop.f32.mrb[0].mxu0
        %v3295 = vadd.f32 %v3133, %v3294
        %v3296 = vpop.f32.mrb[0].mxu0
        %v3297 = vpop.f32.mrb[0].mxu0
        %v3298 = vadd.f32 %v3133, %v3297
        %v3299 = vpop.f32.mrb[0].mxu0
        %3300 = vmatprep.mubr.bf16.mxu0 0
        %3301 = vmatmul.mubr.bf16.gmra.mrb[0].mxu0 %v3206
        %v3302 = vpop.f32.mrb[0].mxu0
        %v3303 = vadd.f32 %v3133, %v3302
        %v3304 = vpop.f32.mrb[0].mxu0
        %v3305 = vpop.f32.mrb[0].mxu0
        %v3306 = vadd.f32 %v3133, %v3305
        %v3307 = vpop.f32.mrb[0].mxu0
        %3308 = vmatprep.mubr.bf16.mxu0 0
        %3309 = vmatmul.mubr.bf16.gmra.mrb[0].mxu0 %v3209
        %v3310 = vpop.f32.mrb[0].mxu0
        %v3311 = vadd.f32 %v3133, %v3310
        %v3312 = vpop.f32.mrb[0].mxu0
        %v3313 = vpop.f32.mrb[0].mxu0
        %v3314 = vadd.f32 %v3133, %v3313
        %v3315 = vpop.f32.mrb[0].mxu0
        %3316 = vmatprep.mubr.bf16.mxu0 0
        %3317 = vmatmul.mubr.bf16.gmra.mrb[0].mxu0 %v3212
        %v3318 = vpop.f32.mrb[0].mxu0
        %v3319 = vadd.f32 %v3133, %v3318
        %v3320 = vpop.f32.mrb[0].mxu0
        %v3321 = vpop.f32.mrb[0].mxu0
        %v3322 = vadd.f32 %v3133, %v3321
        %v3323 = vpop.f32.mrb[0].mxu0
        %3324 = vmatprep.mubr.bf16.mxu0 0
        %3325 = vmatmul.mubr.bf16.gmra.mrb[0].mxu0 %v3215
        %v3326 = vpop.f32.mrb[0].mxu0
        %v3327 = vadd.f32 %v3133, %v3326
        %v3328 = vpop.f32.mrb[0].mxu0
        %v3329 = vpop.f32.mrb[0].mxu0
        %v3330 = vadd.f32 %v3133, %v3329
        %v3331 = vpop.f32.mrb[0].mxu0
        %3332 = vmatprep.mubr.bf16.mxu0 0
        %3333 = vmatmul.mubr.bf16.gmra.mrb[0].mxu0 %v3218
        %v3334 = vpop.f32.mrb[0].mxu0
        %v3335 = vadd.f32 %v3133, %v3334
        %v3336 = vpop.f32.mrb[0].mxu0
        %v3337 = vpop.f32.mrb[0].mxu0
        %v3338 = vadd.f32 %v3133, %v3337
        %v3339 = vpop.f32.mrb[0].mxu0
        %3340 = vmatprep.mubr.bf16.mxu0 0
        %3341 = vmatmul.mubr.bf16.gmra.mrb[0].mxu0 %v3221
        %v3342 = vpop.f32.mrb[0].mxu0
        %v3343 = vadd.f32 %v3133, %v3342
        %v3344 = vpop.f32.mrb[0].mxu0
        %v3345 = vpop.f32.mrb[0].mxu0
        %v3346 = vadd.f32 %v3133, %v3345
        %v3347 = vpop.f32.mrb[0].mxu0
        %3348 = vmatprep.mubr.bf16.mxu0 0
        %3349 = vmatmul.mubr.bf16.gmra.mrb[0].mxu0 %v3224
        %v3350 = vpop.f32.mrb[0].mxu0
        %v3351 = vadd.f32 %v3133, %v3350
        %v3352 = vpop.f32.mrb[0].mxu0
        %v3353 = vpop.f32.mrb[0].mxu0
        %v3354 = vadd.f32 %v3133, %v3353
        %v3355 = vpop.f32.mrb[0].mxu0
        %3356 = vmatprep.mubr.bf16.mxu0 0
        %3357 = vmatmul.mubr.bf16.gmra.mrb[0].mxu0 %v3227
        %v3358 = vpop.f32.mrb[0].mxu0
        %v3359 = vadd.f32 %v3133, %v3358
        %v3360 = vpop.f32.mrb[0].mxu0
        %v3361 = vpop.f32.mrb[0].mxu0
        %v3362 = vadd.f32 %v3133, %v3361
        %v3363 = vpop.f32.mrb[0].mxu0
        %3364 = vmatprep.mubr.bf16.mxu0 0
        %3365 = vmatmul.mubr.bf16.gmra.mrb[0].mxu0 %v3230
        %v3366 = vpop.f32.mrb[0].mxu0
        %v3367 = vadd.f32 %v3133, %v3366
        %v3368 = vpop.f32.mrb[0].mxu0
        %v3369 = vpop.f32.mrb[0].mxu0
        %v3370 = vadd.f32 %v3133, %v3369
        %v3371 = vpop.f32.mrb[0].mxu0
        %3372 = vmatprep.mubr.bf16.mxu0 0
        %3373 = vmatmul.mubr.bf16.gmra.mrb[0].mxu0 %v3233
        %v3374 = vpop.f32.mrb[0].mxu0
        %v3375 = vadd.f32 %v3133, %v3374
        %v3376 = vpop.f32.mrb[0].mxu0
        %v3377 = vpop.f32.mrb[0].mxu0
        %v3378 = vadd.f32 %v3133, %v3377
        %v3379 = vpop.f32.mrb[0].mxu0
        %3380 = vmatprep.mubr.bf16.mxu0 0
        %3381 = vmatmul.mubr.bf16.gmra.mrb[0].mxu0 %v3236
        %v3382 = vpop.f32.mrb[0].mxu0
        %v3383 = vadd.f32 %v3133, %v3382
        %v3384 = vpop.f32.mrb[0].mxu0
        %v3385 = vpop.f32.mrb[0].mxu0
        %v3386 = vadd.f32 %v3133, %v3385
        %v3387 = vpop.f32.mrb[0].mxu0
        %3388 = vmatprep.mubr.bf16.mxu0 0
        %3389 = vmatmul.mubr.bf16.gmra.mrb[0].mxu0 %v3239
        %v3390 = vpop.f32.mrb[0].mxu0
        %v3391 = vadd.f32 %v3133, %v3390
        %v3392 = vpop.f32.mrb[0].mxu0
        %v3393 = vpop.f32.mrb[0].mxu0
        %v3394 = vadd.f32 %v3133, %v3393
        %v3395 = vpop.f32.mrb[0].mxu0
        %3396 = vmatprep.mubr.bf16.mxu0 0
        %3397 = vmatmul.mubr.bf16.gmra.mrb[0].mxu0 %v3242
        %v3398 = vpop.f32.mrb[0].mxu0
        %v3399 = vadd.f32 %v3133, %v3398
        %v3400 = vpop.f32.mrb[0].mxu0
        %v3401 = vpop.f32.mrb[0].mxu0
        %v3402 = vadd.f32 %v3133, %v3401
        %v3403 = vpop.f32.mrb[0].mxu0
        %3404 = vdwg.mxu0
        %v3405 = vadd.f32 %v3279, %v498
        %v3406 = vadd.f32 %v3282, %v501
        %v3407 = vadd.f32 %v3287, %v506
        %v3408 = vadd.f32 %v3290, %v509
        %v3409 = vadd.f32 %v3295, %v514
        %v3410 = vadd.f32 %v3298, %v517
        %v3411 = vadd.f32 %v3303, %v522
        %v3412 = vadd.f32 %v3306, %v525
        %v3413 = vadd.f32 %v3311, %v530
        %v3414 = vadd.f32 %v3314, %v533
        %v3415 = vadd.f32 %v3319, %v538
        %v3416 = vadd.f32 %v3322, %v541
        %v3417 = vadd.f32 %v3327, %v546
        %v3418 = vadd.f32 %v3330, %v549
        %v3419 = vadd.f32 %v3335, %v554
        %v3420 = vadd.f32 %v3338, %v557
        %v3421 = vadd.f32 %v3343, %v562
        %v3422 = vadd.f32 %v3346, %v565
        %v3423 = vadd.f32 %v3351, %v570
        %v3424 = vadd.f32 %v3354, %v573
        %v3425 = vadd.f32 %v3359, %v578
        %v3426 = vadd.f32 %v3362, %v581
        %v3427 = vadd.f32 %v3367, %v586
        %v3428 = vadd.f32 %v3370, %v589
        %v3429 = vadd.f32 %v3375, %v594
        %v3430 = vadd.f32 %v3378, %v597
        %v3431 = vadd.f32 %v3383, %v602
        %v3432 = vadd.f32 %v3386, %v605
        %v3433 = vadd.f32 %v3391, %v610
        %v3434 = vadd.f32 %v3394, %v613
        %v3435 = vadd.f32 %v3399, %v618
        %v3436 = vadd.f32 %v3402, %v621
        %v3437 = vmax.f32 %v3405, 0.0
        %v3438 = vmax.f32 %v3406, 0.0
        %v3439 = vmax.f32 %v3407, 0.0
        %v3440 = vmax.f32 %v3408, 0.0
        %v3441 = vmax.f32 %v3409, 0.0
        %v3442 = vmax.f32 %v3410, 0.0
        %v3443 = vmax.f32 %v3411, 0.0
        %v3444 = vmax.f32 %v3412, 0.0
        %v3445 = vmax.f32 %v3413, 0.0
        %v3446 = vmax.f32 %v3414, 0.0
        %v3447 = vmax.f32 %v3415, 0.0
        %v3448 = vmax.f32 %v3416, 0.0
        %v3449 = vmax.f32 %v3417, 0.0
        %v3450 = vmax.f32 %v3418, 0.0
        %v3451 = vmax.f32 %v3419, 0.0
        %v3452 = vmax.f32 %v3420, 0.0
        %v3453 = vmax.f32 %v3421, 0.0
        %v3454 = vmax.f32 %v3422, 0.0
        %v3455 = vmax.f32 %v3423, 0.0
        %v3456 = vmax.f32 %v3424, 0.0
        %v3457 = vmax.f32 %v3425, 0.0
        %v3458 = vmax.f32 %v3426, 0.0
        %v3459 = vmax.f32 %v3427, 0.0
        %v3460 = vmax.f32 %v3428, 0.0
        %v3461 = vmax.f32 %v3429, 0.0
        %v3462 = vmax.f32 %v3430, 0.0
        %v3463 = vmax.f32 %v3431, 0.0
        %v3464 = vmax.f32 %v3432, 0.0
        %v3465 = vmax.f32 %v3433, 0.0
        %v3466 = vmax.f32 %v3434, 0.0
        %v3467 = vmax.f32 %v3435, 0.0
        %v3468 = vmax.f32 %v3436, 0.0
        %3469 = vst.msk [vmem:[%s325] sm:$0xff] %vm414, %v3437
        %3470 = vst.msk [vmem:[%s325 + $0x8] sm:$0xff] %vm414, %v3438
        %3471 = vst.msk [vmem:[%s325 + $0x10] sm:$0xff] %vm414, %v3439
        %3472 = vst.msk [vmem:[%s325 + $0x18] sm:$0xff] %vm414, %v3440
        %3473 = vst.msk [vmem:[%s325 + $0x20] sm:$0xff] %vm414, %v3441
        %3474 = vst.msk [vmem:[%s325 + $0x28] sm:$0xff] %vm414, %v3442
        %3475 = vst.msk [vmem:[%s325 + $0x30] sm:$0xff] %vm414, %v3443
        %3476 = vst.msk [vmem:[%s325 + $0x38] sm:$0xff] %vm414, %v3444
        %3477 = vst.msk [vmem:[%s325 + $0x40] sm:$0xff] %vm414, %v3445
        %3478 = vst.msk [vmem:[%s325 + $0x48] sm:$0xff] %vm414, %v3446
        %3479 = vst.msk [vmem:[%s325 + $0x50] sm:$0xff] %vm414, %v3447
        %3480 = vst.msk [vmem:[%s325 + $0x58] sm:$0xff] %vm414, %v3448
        %3481 = vst.msk [vmem:[%s325 + $0x60] sm:$0xff] %vm414, %v3449
        %3482 = vst.msk [vmem:[%s325 + $0x68] sm:$0xff] %vm414, %v3450
        %3483 = vst.msk [vmem:[%s325 + $0x70] sm:$0xff] %vm414, %v3451
        %3484 = vst.msk [vmem:[%s325 + $0x78] sm:$0xff] %vm414, %v3452
        %3485 = vst.msk [vmem:[%s325 + $0x80] sm:$0xff] %vm414, %v3453
        %3486 = vst.msk [vmem:[%s325 + $0x88] sm:$0xff] %vm414, %v3454
        %3487 = vst.msk [vmem:[%s325 + $0x90] sm:$0xff] %vm414, %v3455
        %3488 = vst.msk [vmem:[%s325 + $0x98] sm:$0xff] %vm414, %v3456
        %3489 = vst.msk [vmem:[%s325 + $0xa0] sm:$0xff] %vm414, %v3457
        %3490 = vst.msk [vmem:[%s325 + $0xa8] sm:$0xff] %vm414, %v3458
        %3491 = vst.msk [vmem:[%s325 + $0xb0] sm:$0xff] %vm414, %v3459
        %3492 = vst.msk [vmem:[%s325 + $0xb8] sm:$0xff] %vm414, %v3460
        %3493 = vst.msk [vmem:[%s325 + $0xc0] sm:$0xff] %vm414, %v3461
        %3494 = vst.msk [vmem:[%s325 + $0xc8] sm:$0xff] %vm414, %v3462
        %3495 = vst.msk [vmem:[%s325 + $0xd0] sm:$0xff] %vm414, %v3463
        %3496 = vst.msk [vmem:[%s325 + $0xd8] sm:$0xff] %vm414, %v3464
        %3497 = vst.msk [vmem:[%s325 + $0xe0] sm:$0xff] %vm414, %v3465
        %3498 = vst.msk [vmem:[%s325 + $0xe8] sm:$0xff] %vm414, %v3466
        %3499 = vst.msk [vmem:[%s325 + $0xf0] sm:$0xff] %vm414, %v3467
        %3500 = vst.msk [vmem:[%s325 + $0xf8] sm:$0xff] %vm414, %v3468
        %s3501 = sand.u32 %s185, 1
        %s3502 = scalar_lea.sflag [#allocation4], %s3501
        %s3503 = sand.u32 %s185, 1
        %s3504 = smul.addr %s3503, 256
        %s3505 = scalar_lea.vmem [#allocation8], %s3504
        // Predicated region
        $region61: #{tpu_custom_call.1} parent=47 // pred_check
          %p3506 = pneg %p195
        $region62: #{tpu_custom_call.1} parent=47 // pred_check_branch
          %3508 = sbr.rel (%p3506) target = $region64
        $region63: #{tpu_custom_call.1} parent=47 // pred_region
          %s3510 = ssub.s32 4096, 4096
          %3511 = vsyncadd %s3502, %s3510
          %s3512 = smul.addr %s25, 32
          %s3513 = smul.addr %s3512, 128
          %s3514 = scalar_lea.hbm %s7, %s3513
          %s3515 = sshll.u32 %s3505, 4
          %s3516 = int_to_ptr.vmem [resolvable:$true] %s3515
          %3521 = dma.vmem_to_hbm [thread:$0]  %s3516, 4096, %s3514, %s3502, 128, 128, 8
        $region64: #{tpu_custom_call.1} parent=47 // pred_fallthru
          _
      $region48: #{tpu_custom_call.1} parent=5 // pred_fallthru
        _
      %p3522 = scmp.le.s32.totalorder 2, %s20
      // Predicated region
      $region65: #{tpu_custom_call.1} parent=5 // pred_check
        %p3523 = pneg %p3522
      $region66: #{tpu_custom_call.1} parent=5 // pred_check_branch
        %3525 = sbr.rel (%p3523) target = $region68
      $region67: #{tpu_custom_call.1} parent=5 // pred_region
        %s3526 = ssub.s32 %s20, 2
        // Predicated region
        $region69: #{tpu_custom_call.1} parent=67 // pred_check
          %p3527 = pneg %p201
        $region70: #{tpu_custom_call.1} parent=67 // pred_check_branch
          %3529 = sbr.rel (%p3527) target = $region72
        $region71: #{tpu_custom_call.1} parent=67 // pred_region
          %s3530 = sand.u32 %s186, 1
          %s3531 = scalar_lea.sflag [#allocation4], %s3530
          %s3532 = sand.u32 %s186, 1
          %s3533 = smul.addr %s3532, 256
          %s3534 = scalar_lea.vmem [#allocation8], %s3533
          %3535 = dma.done %s3531, 4096
        $region72: #{tpu_custom_call.1} parent=67 // pred_fallthru
          _
      $region68: #{tpu_custom_call.1} parent=5 // pred_fallthru
        _
    $region6: #{tpu_custom_call.1} parent=1 // loop_footer
      %s24 = sadd.s32 1, %s20
    $region7: #{tpu_custom_call.1} parent=1 // loop_footer_branch
      %19 = sbr.rel target = $region3
    $region8: #{tpu_custom_call.1} parent=1 // loop_exit
      _
    %3536 = vsyncpa [#allocation3], 1
    %s3537 = scalar_lea.sflag [#allocation3], 1
    %3538 = vsyncpa %s3537, 1
    %3539 = vsyncpa [#allocation6], 1
    %3540 = vsyncpa [#allocation4], 1
    %s3541 = scalar_lea.sflag [#allocation4], 1
    %3542 = vsyncpa %s3541, 1

</llo_original>
